<compile_context>
chip_gen: v6e
topology: v6e:2x2x1
jax: 0.10.0
libtpu: 0.0.40
codegen_flags: <defaults>
</compile_context>

<pallas_src>
import functools

import numpy as np

import jax
import jax.numpy as jnp
from jax import lax
from jax.experimental import pallas as pl
from jax.experimental.pallas import tpu as pltpu

HIDDEN = 200          # "nn = 200" in the module
HIDDEN_PAD = 256      # lane-aligned hidden dim (zero padded)
NUM_CLASSES = 2
NEG = -1e30           # finite "-inf" for the running segment max


def make_mlpnet_kernel(num_graphs: int, tile_n: int, tiles_per_split: int):
    def kernel(gptr_ref, tile_g0_ref, tile_g1_ref,             # scalar prefetch (SMEM)
               x_ref, brow_ref, w1_ref, b1_ref, w2_ref, b2_ref,
               sum_ref, max_ref):                              # per-split partial pools
        c = pl.program_id(0)          # split (TensorCore) axis -> "parallel"
        i = pl.program_id(1)          # node-tile axis within split -> "arbitrary"
        tile_idx = c * tiles_per_split + i
        tile_base = tile_idx * tile_n

        # Output refs double as accumulators (same block across the i axis).
        @pl.when(i == 0)
        def _init():
            sum_ref[...] = jnp.zeros_like(sum_ref)
            max_ref[...] = jnp.full_like(max_ref, NEG)

        # F.dropout(p=0.1, training=False) is the identity in eval mode.
        x = x_ref[...]                                             # (TN, F) bf16
        h = jnp.dot(x, w1_ref[...],
                    preferred_element_type=jnp.float32) + b1_ref[...]
        h = jnp.maximum(h, 0.0)                                    # f32
        h = jnp.dot(h.astype(jnp.bfloat16), w2_ref[...],
                    preferred_element_type=jnp.float32) + b2_ref[...]
        h = jnp.maximum(h, 0.0)                                    # (TN, 256) f32
        h16 = h.astype(jnp.bfloat16)                               # bf16 copy for MXU

        # --- global_add_pool: one-hot (G, TN) @ h on the MXU.
        # bf16 x bf16 with f32 accumulation -> a single MXU pass (0/1 exact in bf16).
        brow = brow_ref[...]                                       # (1, TN) i32
        gids = lax.broadcasted_iota(jnp.int32, (num_graphs, tile_n), 0)
        onehot = (gids == brow).astype(jnp.bfloat16)               # (G, TN)
        sum_ref[...] += jnp.dot(onehot, h16,
                                preferred_element_type=jnp.float32)

        # --- global_max_pool: batch ids are sorted, so only graphs in
        # [g_lo, g_hi) touch this tile; graph g's rows are the contiguous range
        # [gptr[g] - tile_base, gptr[g+1] - tile_base).  The loop trip count is
        # the number of graphs present in the tile, independent of num_graphs.
        row_ids = lax.broadcasted_iota(jnp.int32, (tile_n, 1), 0)
        neg = jnp.float32(NEG)
        g_lo = tile_g0_ref[tile_idx]
        g_hi = tile_g1_ref[tile_idx]

        @pl.loop(g_lo, g_hi)
        def _seg_max(g):
            lo = gptr_ref[g] - tile_base
            hi = gptr_ref[g + 1] - tile_base
            mask = (row_ids >= lo) & (row_ids < hi)                # (TN, 1)
            mg = jnp.max(jnp.where(mask, h, neg),
                         axis=0, keepdims=True)                    # (1, 256) f32
            cur = max_ref[pl.ds(g, 1), :]
            max_ref[pl.ds(g, 1), :] = jnp.maximum(cur, mg)

    return kernel


def _pad_params(w1, b1, w2, b2):
    """Zero-pad HIDDEN 200 -> 256 (numerically identical) and cast MXU inputs."""
    f = w1.shape[0]
    h, hp = HIDDEN, HIDDEN_PAD
    w1p = jnp.zeros((f, hp), jnp.float32).at[:, :h].set(w1)
    b1p = jnp.zeros((1, hp), jnp.float32).at[:, :h].set(b1.reshape(1, -1))
    w2p = jnp.zeros((hp, hp), jnp.float32).at[:h, :h].set(w2)
    b2p = jnp.zeros((1, hp), jnp.float32).at[:, :h].set(b2.reshape(1, -1))
    return (w1p.astype(jnp.bfloat16), b1p, w2p.astype(jnp.bfloat16), b2p)


@functools.partial(jax.jit, static_argnames=("num_graphs", "tile_n", "num_splits"))
def mlpnet_forward(x, batch, params, *, num_graphs, tile_n=1024, num_splits=2):
    """x: (N, F) f32, batch: (N,) sorted int32 graph ids in [0, num_graphs)."""
    n, f = x.shape
    w1, b1, w2, b2, w3, b3 = params
    w1p, b1p, w2p, b2p = _pad_params(w1, b1, w2, b2)

    n_tiles = -(-n // tile_n)
    tiles_per_split = -(-n_tiles // num_splits)
    n_tiles_total = tiles_per_split * num_splits
    n_pad = n_tiles_total * tile_n

    # Pad nodes: zero features, sentinel graph id -1 (excluded from both pools).
    x_p = jnp.zeros((n_pad, f), jnp.bfloat16).at[:n, :].set(x.astype(jnp.bfloat16))
    batch = batch.astype(jnp.int32).reshape(n)
    batch_row = jnp.full((1, n_pad), -1, jnp.int32).at[0, :n].set(batch)

    # Scalar-prefetch tables (SMEM): per-graph node offsets + per-tile graph range.
    counts = jnp.zeros((num_graphs,), jnp.int32).at[batch].add(1)
    gptr = jnp.concatenate(
        [jnp.zeros((1,), jnp.int32), jnp.cumsum(counts).astype(jnp.int32)])
    tile_starts = jnp.arange(n_tiles_total, dtype=jnp.int32) * tile_n
    last_node = jnp.maximum(jnp.minimum(tile_starts + tile_n, n) - 1, 0)
    tile_g0 = jnp.clip(jnp.searchsorted(gptr, tile_starts, side="right") - 1,
                       0, num_graphs).astype(jnp.int32)
    tile_g1 = jnp.clip(jnp.searchsorted(gptr, last_node, side="right"),
                       0, num_graphs).astype(jnp.int32)
    tile_g1 = jnp.where(tile_starts >= n, tile_g0, tile_g1)   # padded-only tiles: empty

    const = lambda c, i, *_: (0, 0)
    tmap = lambda c, i, *_: (c * tiles_per_split + i, 0)       # node-tile blocks
    grid_spec = pltpu.PrefetchScalarGridSpec(
        num_scalar_prefetch=3,
        grid=(num_splits, tiles_per_split),
        in_specs=[
            pl.BlockSpec((tile_n, f), tmap),                   # x tile
            pl.BlockSpec((1, tile_n),                          # batch ids (lane-major)
                         lambda c, i, *_: (0, c * tiles_per_split + i)),
            pl.BlockSpec(w1p.shape, const),                    # weights stay resident
            pl.BlockSpec(b1p.shape, const),
            pl.BlockSpec(w2p.shape, const),
            pl.BlockSpec(b2p.shape, const),
        ],
        out_specs=[
            pl.BlockSpec((None, num_graphs, HIDDEN_PAD), lambda c, i, *_: (c, 0, 0)),
            pl.BlockSpec((None, num_graphs, HIDDEN_PAD), lambda c, i, *_: (c, 0, 0)),
        ],
    )
    part_sum, part_max = pl.pallas_call(
        make_mlpnet_kernel(num_graphs, tile_n, tiles_per_split),
        out_shape=(
            jax.ShapeDtypeStruct((num_splits, num_graphs, HIDDEN_PAD), jnp.float32),
            jax.ShapeDtypeStruct((num_splits, num_graphs, HIDDEN_PAD), jnp.float32),
        ),
        grid_spec=grid_spec,
        compiler_params=pltpu.CompilerParams(
            # Split node tiles across TensorCores (v7x megacore); the node-tile
            # axis is a reduction into the per-split accumulators.
            dimension_semantics=("parallel", "arbitrary"),
            # Actual footprint is a few MiB at tile_n <= 2048; stay well under
            # v7x's 64 MiB physical VMEM while leaving compiler headroom.
            vmem_limit_bytes=32 * 1024 * 1024),
    )(gptr, tile_g0, tile_g1, x_p, batch_row, w1p, b1p, w2p, b2p)

    # Epilogue in plain JAX: cross-split combine + fc2 + log_softmax (tiny).
    sum_pool = jnp.sum(part_sum, axis=0)[:, :HIDDEN]
    max_pool = jnp.max(part_max, axis=0)[:, :HIDDEN]
    pooled = jnp.concatenate([sum_pool, max_pool], axis=1)          # (G, 400)
    logits = pooled @ w3.astype(jnp.float32) + b3.reshape(1, -1).astype(jnp.float32)
    return jax.nn.log_softmax(logits, axis=1)


def reference_forward(x, batch, params, num_graphs):
    """Pure-JAX reference with the kernel's matmul numerics (bf16 x bf16, f32 acc)."""
    w1, b1, w2, b2, w3, b3 = params
    h = jnp.dot(x.astype(jnp.bfloat16), w1.astype(jnp.bfloat16),
                preferred_element_type=jnp.float32) + b1.reshape(1, -1)
    h = jnp.maximum(h, 0.0)
    h = jnp.dot(h.astype(jnp.bfloat16), w2.astype(jnp.bfloat16),
                preferred_element_type=jnp.float32) + b2.reshape(1, -1)
    h = jnp.maximum(h, 0.0)
    onehot = (jnp.arange(num_graphs)[:, None] == batch[None, :]).astype(jnp.bfloat16)
    sum_pool = jnp.dot(onehot, h.astype(jnp.bfloat16),
                       preferred_element_type=jnp.float32)
    max_pool = jax.ops.segment_max(h, batch, num_segments=num_graphs)
    pooled = jnp.concatenate([sum_pool, max_pool], axis=1)
    logits = pooled @ w3 + b3.reshape(1, -1)
    return jax.nn.log_softmax(logits, axis=1)


if __name__ == "__main__":
    key = jax.random.PRNGKey(0)
    # 600 nodes, 8 node features, 4 graphs; tile_n=256, 2 splits -> grid (2, 2).
    N, F, G = 600, 8, 4
    ks = jax.random.split(key, 7)

    x = jax.random.normal(ks[0], (N, F), jnp.float32)
    batch = jnp.repeat(jnp.arange(G, dtype=jnp.int32), N // G)   # sorted graph ids

    # Deterministic synthetic parameters (shapes from MlpNet.__init__):
    #   conv1: Linear(F, 200), conv2: Linear(200, 200), fc2: Linear(400, 2)
    w1 = 0.1 * jax.random.normal(ks[1], (F, HIDDEN), jnp.float32)
    b1 = 0.01 * jax.random.normal(ks[2], (1, HIDDEN), jnp.float32)
    w2 = 0.1 * jax.random.normal(ks[3], (HIDDEN, HIDDEN), jnp.float32)
    b2 = 0.01 * jax.random.normal(ks[4], (1, HIDDEN), jnp.float32)
    w3 = 0.1 * jax.random.normal(ks[5], (2 * HIDDEN, NUM_CLASSES), jnp.float32)
    b3 = 0.01 * jax.random.normal(ks[6], (1, NUM_CLASSES), jnp.float32)
    params = (w1, b1, w2, b2, w3, b3)

    out = mlpnet_forward(x, batch, params, num_graphs=G, tile_n=256, num_splits=2)
    out = jax.block_until_ready(out)

    ref = reference_forward(x, batch, params, G)
    np.testing.assert_allclose(np.asarray(out), np.asarray(ref), rtol=2e-2, atol=2e-2)
    print("KERNEL_OK")
</pallas_src>

<mosaic_0001>
module attributes {stable_mosaic.version = 11 : i64} {
  func.func private @main(%arg0: i32) attributes {dimension_semantics = [#tpu.dimension_semantics<core_parallel>], iteration_bounds = array<i64: 2>, tpu.core_type = #tpu.core_type<sc_scalar_subcore>, window_params = []} {
    return
  }
}

module attributes {stable_mosaic.version = 11 : i64} {
  func.func private @main(%arg0: i32) attributes {dimension_semantics = [#tpu.dimension_semantics<core_parallel>], iteration_bounds = array<i64: 2>, tpu.core_type = #tpu.core_type<sc_scalar_subcore>, window_params = []} {
    return
  }
}

module attributes {stable_mosaic.version = 11 : i64} {
  func.func @kernel(%arg0: i32, %arg1: i32, %arg2: memref<5xi32, #tpu.memory_space<smem>>, %arg3: memref<4xi32, #tpu.memory_space<smem>>, %arg4: memref<4xi32, #tpu.memory_space<smem>>, %arg5: memref<256x8xbf16, #tpu.memory_space<vmem>>, %arg6: memref<1x256xi32, #tpu.memory_space<vmem>>, %arg7: memref<8x256xbf16, #tpu.memory_space<vmem>>, %arg8: memref<1x256xf32, #tpu.memory_space<vmem>>, %arg9: memref<256x256xbf16, #tpu.memory_space<vmem>>, %arg10: memref<1x256xf32, #tpu.memory_space<vmem>>, %arg11: memref<1x4x256xf32, #tpu.memory_space<vmem>>, %arg12: memref<1x4x256xf32, #tpu.memory_space<vmem>>) attributes {dimension_semantics = [#tpu.dimension_semantics<parallel>, #tpu.dimension_semantics<arbitrary>], iteration_bounds = array<i64: 2, 2>, scalar_prefetch = 3 : i64, scratch_operands = 0 : i64, tpu.core_type = #tpu.core_type<tc>, window_params = [{transform_indices = @transform_0, window_bounds = array<i64: 256, 8>}, {transform_indices = @transform_1, window_bounds = array<i64: 1, 256>}, {pipeline_mode = #tpu.pipeline_mode<synchronous>, transform_indices = @transform_2, window_bounds = array<i64: 8, 256>}, {pipeline_mode = #tpu.pipeline_mode<synchronous>, transform_indices = @transform_3, window_bounds = array<i64: 1, 256>}, {pipeline_mode = #tpu.pipeline_mode<synchronous>, transform_indices = @transform_4, window_bounds = array<i64: 256, 256>}, {pipeline_mode = #tpu.pipeline_mode<synchronous>, transform_indices = @transform_5, window_bounds = array<i64: 1, 256>}, {transform_indices = @transform_6, window_bounds = array<i64: 1, 4, 256>}, {transform_indices = @transform_7, window_bounds = array<i64: 1, 4, 256>}]} {
    %c2_i32 = arith.constant 2 : i32
    %0 = arith.muli %arg0, %c2_i32 : i32
    %1 = arith.addi %0, %arg1 : i32
    %c256_i32 = arith.constant 256 : i32
    %2 = arith.muli %1, %c256_i32 : i32
    %c0_i32 = arith.constant 0 : i32
    %3 = arith.cmpi eq, %arg1, %c0_i32 : i32
    %4 = arith.extui %3 : i1 to i32
    %c0_i32_0 = arith.constant 0 : i32
    %5 = arith.cmpi ne, %4, %c0_i32_0 : i32
    scf.if %5 {
      %cst_28 = arith.constant 0.000000e+00 : f32
      %48 = vector.broadcast %cst_28 : f32 to vector<4x256xf32>
      %c0_29 = arith.constant 0 : index
      %c0_30 = arith.constant 0 : index
      %c0_31 = arith.constant 0 : index
      %49 = vector.load %arg11[%c0_29, %c0_30, %c0_31] : memref<1x4x256xf32, #tpu.memory_space<vmem>>, vector<1x4x256xf32>
      %50 = vector.shape_cast %49 : vector<1x4x256xf32> to vector<4x256xf32>
      %51 = vector.shape_cast %48 : vector<4x256xf32> to vector<1x4x256xf32>
      tpu.vector_store %arg11[%c0_29, %c0_30, %c0_31], %51 {strides = array<i32>} : memref<1x4x256xf32, #tpu.memory_space<vmem>>, vector<1x4x256xf32>,
      %cst_32 = arith.constant -1.000000e+30 : f32
      %52 = vector.broadcast %cst_32 : f32 to vector<4x256xf32>
      %c0_33 = arith.constant 0 : index
      %c0_34 = arith.constant 0 : index
      %c0_35 = arith.constant 0 : index
      %53 = vector.load %arg12[%c0_33, %c0_34, %c0_35] : memref<1x4x256xf32, #tpu.memory_space<vmem>>, vector<1x4x256xf32>
      %54 = vector.shape_cast %53 : vector<1x4x256xf32> to vector<4x256xf32>
      %55 = vector.shape_cast %52 : vector<4x256xf32> to vector<1x4x256xf32>
      tpu.vector_store %arg12[%c0_33, %c0_34, %c0_35], %55 {strides = array<i32>} : memref<1x4x256xf32, #tpu.memory_space<vmem>>, vector<1x4x256xf32>,
    } else {
    }
    %c0 = arith.constant 0 : index
    %c0_1 = arith.constant 0 : index
    %6 = vector.load %arg5[%c0, %c0_1] : memref<256x8xbf16, #tpu.memory_space<vmem>>, vector<256x8xbf16>
    %c0_2 = arith.constant 0 : index
    %c0_3 = arith.constant 0 : index
    %7 = vector.load %arg7[%c0_2, %c0_3] : memref<8x256xbf16, #tpu.memory_space<vmem>>, vector<8x256xbf16>
    %cst = arith.constant dense<0.000000e+00> : vector<256x256xf32>
    %8 = tpu.matmul %6, %7, %cst {dimension_numbers = #tpu.dot_dimension_numbers<[1], [0], [0], [1], [0, 0, 1, 1], [], []>} : vector<256x8xbf16>, vector<8x256xbf16>, vector<256x256xf32> -> vector<256x256xf32>
    %c0_4 = arith.constant 0 : index
    %c0_5 = arith.constant 0 : index
    %9 = vector.load %arg8[%c0_4, %c0_5] : memref<1x256xf32, #tpu.memory_space<vmem>>, vector<1x256xf32>
    %10 = vector.broadcast %9 : vector<1x256xf32> to vector<256x256xf32>
    %11 = arith.addf %8, %10 : vector<256x256xf32>
    %cst_6 = arith.constant 0.000000e+00 : f32
    %12 = vector.broadcast %cst_6 : f32 to vector<256x256xf32>
    %13 = arith.maximumf %11, %12 : vector<256x256xf32>
    %14 = arith.truncf %13 : vector<256x256xf32> to vector<256x256xbf16>
    %c0_7 = arith.constant 0 : index
    %c0_8 = arith.constant 0 : index
    %15 = vector.load %arg9[%c0_7, %c0_8] : memref<256x256xbf16, #tpu.memory_space<vmem>>, vector<256x256xbf16>
    %cst_9 = arith.constant dense<0.000000e+00> : vector<256x256xf32>
    %16 = tpu.matmul %14, %15, %cst_9 {dimension_numbers = #tpu.dot_dimension_numbers<[1], [0], [0], [1], [0, 0, 1, 1], [], []>} : vector<256x256xbf16>, vector<256x256xbf16>, vector<256x256xf32> -> vector<256x256xf32>
    %c0_10 = arith.constant 0 : index
    %c0_11 = arith.constant 0 : index
    %17 = vector.load %arg10[%c0_10, %c0_11] : memref<1x256xf32, #tpu.memory_space<vmem>>, vector<1x256xf32>
    %18 = vector.broadcast %17 : vector<1x256xf32> to vector<256x256xf32>
    %19 = arith.addf %16, %18 : vector<256x256xf32>
    %cst_12 = arith.constant 0.000000e+00 : f32
    %20 = vector.broadcast %cst_12 : f32 to vector<256x256xf32>
    %21 = arith.maximumf %19, %20 : vector<256x256xf32>
    %22 = arith.truncf %21 : vector<256x256xf32> to vector<256x256xbf16>
    %c0_13 = arith.constant 0 : index
    %c0_14 = arith.constant 0 : index
    %23 = vector.load %arg6[%c0_13, %c0_14] : memref<1x256xi32, #tpu.memory_space<vmem>>, vector<1x256xi32>
    %24 = tpu.iota {dimensions = array<i32: 0>} : vector<4x256xi32>
    %25 = vector.broadcast %23 : vector<1x256xi32> to vector<4x256xi32>
    %26 = arith.cmpi eq, %24, %25 : vector<4x256xi32>
    %27 = arith.extui %26 : vector<4x256xi1> to vector<4x256xi32>
    %28 = arith.sitofp %27 : vector<4x256xi32> to vector<4x256xf32>
    %29 = arith.truncf %28 : vector<4x256xf32> to vector<4x256xbf16>
    %c0_15 = arith.constant 0 : index
    %c0_16 = arith.constant 0 : index
    %c0_17 = arith.constant 0 : index
    %30 = vector.load %arg11[%c0_15, %c0_16, %c0_17] : memref<1x4x256xf32, #tpu.memory_space<vmem>>, vector<1x4x256xf32>
    %31 = vector.shape_cast %30 : vector<1x4x256xf32> to vector<4x256xf32>
    %cst_18 = arith.constant dense<0.000000e+00> : vector<4x256xf32>
    %32 = tpu.matmul %29, %22, %cst_18 {dimension_numbers = #tpu.dot_dimension_numbers<[1], [0], [0], [1], [0, 0, 1, 1], [], []>} : vector<4x256xbf16>, vector<256x256xbf16>, vector<4x256xf32> -> vector<4x256xf32>
    %33 = arith.addf %31, %32 : vector<4x256xf32>
    %c0_19 = arith.constant 0 : index
    %c0_20 = arith.constant 0 : index
    %c0_21 = arith.constant 0 : index
    %34 = vector.load %arg11[%c0_19, %c0_20, %c0_21] : memref<1x4x256xf32, #tpu.memory_space<vmem>>, vector<1x4x256xf32>
    %35 = vector.shape_cast %34 : vector<1x4x256xf32> to vector<4x256xf32>
    %36 = vector.shape_cast %33 : vector<4x256xf32> to vector<1x4x256xf32>
    tpu.vector_store %arg11[%c0_19, %c0_20, %c0_21], %36 {strides = array<i32>} : memref<1x4x256xf32, #tpu.memory_space<vmem>>, vector<1x4x256xf32>,
    %37 = tpu.iota {dimensions = array<i32: 0>} : vector<256x1xi32>
    %38 = arith.index_cast %1 : i32 to index
    %39 = memref.load %arg3[%38] : memref<4xi32, #tpu.memory_space<smem>>
    %40 = arith.index_cast %1 : i32 to index
    %41 = memref.load %arg4[%40] : memref<4xi32, #tpu.memory_space<smem>>
    %42 = arith.subi %41, %39 : i32
    %c1_i32 = arith.constant 1 : i32
    %c1_i32_22 = arith.constant 1 : i32
    %43 = arith.subi %c1_i32, %c1_i32_22 : i32
    %44 = arith.addi %42, %43 : i32
    %c1_i32_23 = arith.constant 1 : i32
    %45 = arith.divsi %44, %c1_i32_23 : i32
    %c1_i32_24 = arith.constant 1 : i32
    %cst_25 = arith.constant -1.000000e+30 : f32
    %c0_i32_26 = arith.constant 0 : i32
    %46 = arith.subi %45, %c0_i32_26 : i32
    %47 = arith.addi %c0_i32_26, %46 : i32
    %c1_i32_27 = arith.constant 1 : i32
    scf.for %arg13 = %c0_i32_26 to %47 step %c1_i32_27  : i32 {
      %48 = arith.muli %arg13, %c1_i32_24 : i32
      %49 = arith.addi %39, %48 : i32
      %50 = arith.index_cast %49 : i32 to index
      %51 = memref.load %arg2[%50] : memref<5xi32, #tpu.memory_space<smem>>
      %52 = arith.subi %51, %2 : i32
      %c1_i32_28 = arith.constant 1 : i32
      %53 = arith.addi %49, %c1_i32_28 : i32
      %54 = arith.index_cast %53 : i32 to index
      %55 = memref.load %arg2[%54] : memref<5xi32, #tpu.memory_space<smem>>
      %56 = arith.subi %55, %2 : i32
      %57 = vector.broadcast %52 : i32 to vector<256x1xi32>
      %58 = arith.cmpi sge, %37, %57 : vector<256x1xi32>
      %59 = vector.broadcast %56 : i32 to vector<256x1xi32>
      %60 = arith.cmpi slt, %37, %59 : vector<256x1xi32>
      %61 = arith.andi %58, %60 : vector<256x1xi1>
      %62 = vector.shape_cast %61 : vector<256x1xi1> to vector<256x1xi1>
      %63 = vector.broadcast %62 : vector<256x1xi1> to vector<256x256xi1>
      %64 = vector.broadcast %cst_25 : f32 to vector<256x256xf32>
      %65 = arith.select %63, %21, %64 : vector<256x256xi1>, vector<256x256xf32>
      %cst_29 = arith.constant dense<0xFF800000> : vector<256xf32>
      %66 = vector.multi_reduction <maximumf>, %65, %cst_29 [0] : vector<256x256xf32> to vector<256xf32>
      %67 = vector.shape_cast %66 : vector<256xf32> to vector<1x256xf32>
      %c0_30 = arith.constant 0 : index
      %68 = arith.index_cast %49 : i32 to index
      %c0_31 = arith.constant 0 : index
      %69 = vector.load %arg12[%c0_30, %68, %c0_31] : memref<1x4x256xf32, #tpu.memory_space<vmem>>, vector<1x1x256xf32>
      %70 = vector.shape_cast %69 : vector<1x1x256xf32> to vector<1x256xf32>
      %71 = arith.maximumf %70, %67 : vector<1x256xf32>
      %c0_32 = arith.constant 0 : index
      %72 = arith.index_cast %49 : i32 to index
      %c0_33 = arith.constant 0 : index
      %73 = vector.load %arg12[%c0_32, %72, %c0_33] : memref<1x4x256xf32, #tpu.memory_space<vmem>>, vector<1x1x256xf32>
      %74 = vector.shape_cast %73 : vector<1x1x256xf32> to vector<1x256xf32>
      %75 = vector.shape_cast %71 : vector<1x256xf32> to vector<1x1x256xf32>
      tpu.vector_store %arg12[%c0_32, %72, %c0_33], %75 {strides = array<i32>} : memref<1x4x256xf32, #tpu.memory_space<vmem>>, vector<1x1x256xf32>,
    }
    return
  }
  func.func @transform_0(%arg0: i32, %arg1: i32, %arg2: memref<5xi32, #tpu.memory_space<smem>>, %arg3: memref<4xi32, #tpu.memory_space<smem>>, %arg4: memref<4xi32, #tpu.memory_space<smem>>) -> (i32, i32) {
    %c2_i32 = arith.constant 2 : i32
    %0 = arith.muli %arg0, %c2_i32 : i32
    %1 = arith.addi %0, %arg1 : i32
    %c0_i32 = arith.constant 0 : i32
    %c0_i32_0 = arith.constant 0 : i32
    return %1, %c0_i32 : i32, i32
  }
  func.func @transform_1(%arg0: i32, %arg1: i32, %arg2: memref<5xi32, #tpu.memory_space<smem>>, %arg3: memref<4xi32, #tpu.memory_space<smem>>, %arg4: memref<4xi32, #tpu.memory_space<smem>>) -> (i32, i32) {
    %c2_i32 = arith.constant 2 : i32
    %0 = arith.muli %arg0, %c2_i32 : i32
    %1 = arith.addi %0, %arg1 : i32
    %c0_i32 = arith.constant 0 : i32
    %c0_i32_0 = arith.constant 0 : i32
    return %c0_i32, %1 : i32, i32
  }
  func.func @transform_2(%arg0: i32, %arg1: i32, %arg2: memref<5xi32, #tpu.memory_space<smem>>, %arg3: memref<4xi32, #tpu.memory_space<smem>>, %arg4: memref<4xi32, #tpu.memory_space<smem>>) -> (i32, i32) {
    %c0_i32 = arith.constant 0 : i32
    %c0_i32_0 = arith.constant 0 : i32
    %c0_i32_1 = arith.constant 0 : i32
    return %c0_i32, %c0_i32_0 : i32, i32
  }
  func.func @transform_3(%arg0: i32, %arg1: i32, %arg2: memref<5xi32, #tpu.memory_space<smem>>, %arg3: memref<4xi32, #tpu.memory_space<smem>>, %arg4: memref<4xi32, #tpu.memory_space<smem>>) -> (i32, i32) {
    %c0_i32 = arith.constant 0 : i32
    %c0_i32_0 = arith.constant 0 : i32
    %c0_i32_1 = arith.constant 0 : i32
    return %c0_i32, %c0_i32_0 : i32, i32
  }
  func.func @transform_4(%arg0: i32, %arg1: i32, %arg2: memref<5xi32, #tpu.memory_space<smem>>, %arg3: memref<4xi32, #tpu.memory_space<smem>>, %arg4: memref<4xi32, #tpu.memory_space<smem>>) -> (i32, i32) {
    %c0_i32 = arith.constant 0 : i32
    %c0_i32_0 = arith.constant 0 : i32
    %c0_i32_1 = arith.constant 0 : i32
    return %c0_i32, %c0_i32_0 : i32, i32
  }
  func.func @transform_5(%arg0: i32, %arg1: i32, %arg2: memref<5xi32, #tpu.memory_space<smem>>, %arg3: memref<4xi32, #tpu.memory_space<smem>>, %arg4: memref<4xi32, #tpu.memory_space<smem>>) -> (i32, i32) {
    %c0_i32 = arith.constant 0 : i32
    %c0_i32_0 = arith.constant 0 : i32
    %c0_i32_1 = arith.constant 0 : i32
    return %c0_i32, %c0_i32_0 : i32, i32
  }
  func.func @transform_6(%arg0: i32, %arg1: i32, %arg2: memref<5xi32, #tpu.memory_space<smem>>, %arg3: memref<4xi32, #tpu.memory_space<smem>>, %arg4: memref<4xi32, #tpu.memory_space<smem>>) -> (i32, i32, i32) {
    %c0_i32 = arith.constant 0 : i32
    %c0_i32_0 = arith.constant 0 : i32
    %c0_i32_1 = arith.constant 0 : i32
    return %arg0, %c0_i32, %c0_i32_0 : i32, i32, i32
  }
  func.func @transform_7(%arg0: i32, %arg1: i32, %arg2: memref<5xi32, #tpu.memory_space<smem>>, %arg3: memref<4xi32, #tpu.memory_space<smem>>, %arg4: memref<4xi32, #tpu.memory_space<smem>>) -> (i32, i32, i32) {
    %c0_i32 = arith.constant 0 : i32
    %c0_i32_0 = arith.constant 0 : i32
    %c0_i32_1 = arith.constant 0 : i32
    return %arg0, %c0_i32, %c0_i32_0 : i32, i32, i32
  }
}

</mosaic_0001>

<llo_original>
// kernel: custom-call
$region0: #{custom-call}
  %s0 = inlined_call_operand.vmem [shape: u32[4], index: 0, kind: output, shape index: {}]

// kernel: mlpnet_forward.1
$region0: #{mlpnet_forward.1}
  #allocation0 [shape = 'u32[]', space=smem, size = 0x4, offset = 0x4, fixed_abs, tag = 'smem constant byte address 0x4 - core index']
  #allocation1 [shape = 'u32[144,128]{1,0:T(1,128)}', space=vmem, size = 0x12000, scoped, tag = 'internal scratch']
  #allocation2 [shape = 's32[1]{0}', space=sflag, size = 0x4, scoped, tag = 'scoped memory for mlpnet_forward.1']
  #allocation3 [shape = 'u8[512]{0}', space=smem, size = 0x200, scoped, tag = 'prefetched SMEM operand 0']
  #allocation4 [shape = 'u8[512]{0}', space=smem, size = 0x200, scoped, tag = 'prefetched SMEM operand 1']
  #allocation5 [shape = 'u8[512]{0}', space=smem, size = 0x200, scoped, tag = 'prefetched SMEM operand 2']
  %s0 = inlined_call_operand.vmem [shape: s32[5], index: 0, kind: input, shape index: {}]
  %s1 = inlined_call_operand.vmem [shape: s32[4], index: 1, kind: input, shape index: {}]
  %s2 = inlined_call_operand.vmem [shape: s32[4], index: 2, kind: input, shape index: {}]
  %s3 = inlined_call_operand.vmem [shape: bf16[1024,8], index: 3, kind: input, shape index: {}]
  %s4 = inlined_call_operand.vmem [shape: s32[1,1024], index: 4, kind: input, shape index: {}]
  %s5 = inlined_call_operand.vmem [shape: bf16[8,256], index: 5, kind: input, shape index: {}]
  %s6 = inlined_call_operand.vmem [shape: f32[1,256], index: 6, kind: input, shape index: {}]
  %s7 = inlined_call_operand.vmem [shape: bf16[256,256], index: 7, kind: input, shape index: {}]
  %s8 = inlined_call_operand.vmem [shape: f32[1,256], index: 8, kind: input, shape index: {}]
  %s9 = inlined_call_operand.vmem [shape: f32[2,4,256], index: 9, kind: output, shape index: {0}]
  %s10 = inlined_call_operand.vmem [shape: f32[2,4,256], index: 10, kind: output, shape index: {1}]
  %11 = xla_tuple %s9, %s10
  %s12 = sld [smem:[#allocation0]]
  $region76: #{mlpnet_forward.1} parent=0
    _
  %s14 = ssub.s32 1, %s12
  %s15 = scalar_select 0, %s14, %s12
  %s16 = sshll.u32 %s0, 4
  %s17 = int_to_ptr.vmem [resolvable:$true] %s16
  %19 = dma.vmem_to_smem %s17, 16, [#allocation3], [#allocation2]
  %s20 = sshll.u32 %s1, 4
  %s21 = int_to_ptr.vmem [resolvable:$true] %s20
  %23 = dma.vmem_to_smem %s21, 16, [#allocation4], [#allocation2]
  %s24 = sshll.u32 %s2, 4
  %s25 = int_to_ptr.vmem [resolvable:$true] %s24
  %27 = dma.vmem_to_smem %s25, 16, [#allocation5], [#allocation2]
  %28 = dma.done [#allocation2], 48
  %29 = sfence
  loop: start=0, step=1, limit=6
  $region2: #{mlpnet_forward.1} parent=0 // loop_pre_header
    _
  $region3: #{mlpnet_forward.1} parent=0 // loop_header
    %s31 = sphi 0, %s35
    %p32 = scmp.ge.s32.totalorder %s31, 6
    %s38 = sphi 0, %s50
    %s39 = sphi 0, %s46
    %s40 = sphi 0, %s38
    %s41 = sphi 0, %s39
    %s42 = sphi 0, %s40
    %s43 = sphi 0, %s41
    %s57 = sphi 0, %s59
    %s60 = sphi 0, %s57
    %s61 = sphi 0, %s60
    %s77 = sphi 0, %s61
    %s87 = sphi 0, %s89
    %s90 = sphi 0, %s87
    %s91 = sphi 0, %s90
    %s107 = sphi 0, %s91
    %s111 = sphi 0, %s111
    %s113 = sphi 0, %s111
    %s114 = sphi 0, %s113
    %s128 = sphi 0, %s114
    %s132 = sphi 0, %s132
    %s134 = sphi 0, %s132
    %s135 = sphi 0, %s134
    %s149 = sphi 0, %s135
    %s153 = sphi 0, %s153
    %s155 = sphi 0, %s153
    %s156 = sphi 0, %s155
    %s170 = sphi 0, %s156
    %s174 = sphi 0, %s174
    %s176 = sphi 0, %s174
    %s177 = sphi 0, %s176
    %s191 = sphi 0, %s177
    %s197 = sphi 0, %s199
    %s200 = sphi 0, %s197
    %s201 = sphi 0, %s200
    %s217 = sphi 0, %s201
    %s223 = sphi 0, %s225
    %s226 = sphi 0, %s223
    %s227 = sphi 0, %s226
    %s243 = sphi 0, %s227
  $region4: #{mlpnet_forward.1} parent=0 // loop_header_branch
    %34 = sbr.rel (%p32) target = $region8
  $region5: #{mlpnet_forward.1} parent=0 // loop_body
    %s36 = ssub.s32 %s31, 1
    %s37 = ssub.s32 %s31, 2
    %s44 = sadd.s32 1, %s39
    %p45 = scmp.ge.s32.totalorder %s44, 2
    %s46 = scalar_select %p45, 0, %s44
    %s47 = sadd.s32 1, %s38
    %s48 = scalar_select %p45, %s47, %s38
    %p49 = scmp.ge.s32.totalorder %s48, 2
    %s50 = scalar_select %p49, 0, %s48
    %s51 = smul.u32 %s38, 2
    %s52 = sadd.s32 %s51, %s39
    %s53 = smul.u32 %s50, 2
    %s54 = sadd.s32 %s53, %s46
    %s55 = ssub.s32 %s52, %s54
    %p56 = scmp.eq.s32.totalorder %s55, 0
    %s58 = sadd.s32 %s57, 1
    %s59 = scalar_select %p56, %s57, %s58
    %p62 = pneg %p56
    %p63 = scmp.eq.s32.totalorder %s31, 3
    %p64 = por %p62, %p63
    %p65 = scmp.ne.s32.totalorder %s57, %s60
    %p66 = scmp.eq.s32.totalorder %s31, 0
    %p67 = por %p65, %p66
    %p68 = scmp.ne.s32.totalorder %s57, %s60
    %p69 = scmp.eq.s32.totalorder %s36, 3
    %p70 = por %p68, %p69
    %p71 = scmp.ne.s32.totalorder %s60, %s61
    %p72 = scmp.eq.s32.totalorder %s36, 0
    %p73 = por %p71, %p72
    %p74 = scmp.ne.s32.totalorder %s60, %s61
    %p75 = scmp.eq.s32.totalorder %s37, 3
    %p76 = por %p74, %p75
    %p78 = scmp.ne.s32.totalorder %s61, %s77
    %p79 = scmp.eq.s32.totalorder %s37, 0
    %p80 = por %p78, %p79
    %s81 = smul.u32 %s38, 2
    %s82 = sadd.s32 %s81, %s39
    %s83 = smul.u32 %s50, 2
    %s84 = sadd.s32 %s83, %s46
    %s85 = ssub.s32 %s82, %s84
    %p86 = scmp.eq.s32.totalorder %s85, 0
    %s88 = sadd.s32 %s87, 1
    %s89 = scalar_select %p86, %s87, %s88
    %p92 = pneg %p86
    %p93 = scmp.eq.s32.totalorder %s31, 3
    %p94 = por %p92, %p93
    %p95 = scmp.ne.s32.totalorder %s87, %s90
    %p96 = scmp.eq.s32.totalorder %s31, 0
    %p97 = por %p95, %p96
    %p98 = scmp.ne.s32.totalorder %s87, %s90
    %p99 = scmp.eq.s32.totalorder %s36, 3
    %p100 = por %p98, %p99
    %p101 = scmp.ne.s32.totalorder %s90, %s91
    %p102 = scmp.eq.s32.totalorder %s36, 0
    %p103 = por %p101, %p102
    %p104 = scmp.ne.s32.totalorder %s90, %s91
    %p105 = scmp.eq.s32.totalorder %s37, 3
    %p106 = por %p104, %p105
    %p108 = scmp.ne.s32.totalorder %s91, %s107
    %p109 = scmp.eq.s32.totalorder %s37, 0
    %p110 = por %p108, %p109
    %s112 = sadd.s32 %s111, 1
    %p115 = scmp.eq.s32.totalorder %s31, 3
    %p116 = scmp.ne.s32.totalorder %s111, %s113
    %p117 = scmp.eq.s32.totalorder %s31, 0
    %p118 = por %p116, %p117
    %p119 = scmp.ne.s32.totalorder %s111, %s113
    %p120 = scmp.eq.s32.totalorder %s36, 3
    %p121 = por %p119, %p120
    %p122 = scmp.ne.s32.totalorder %s113, %s114
    %p123 = scmp.eq.s32.totalorder %s36, 0
    %p124 = por %p122, %p123
    %p125 = scmp.ne.s32.totalorder %s113, %s114
    %p126 = scmp.eq.s32.totalorder %s37, 3
    %p127 = por %p125, %p126
    %p129 = scmp.ne.s32.totalorder %s114, %s128
    %p130 = scmp.eq.s32.totalorder %s37, 0
    %p131 = por %p129, %p130
    %s133 = sadd.s32 %s132, 1
    %p136 = scmp.eq.s32.totalorder %s31, 3
    %p137 = scmp.ne.s32.totalorder %s132, %s134
    %p138 = scmp.eq.s32.totalorder %s31, 0
    %p139 = por %p137, %p138
    %p140 = scmp.ne.s32.totalorder %s132, %s134
    %p141 = scmp.eq.s32.totalorder %s36, 3
    %p142 = por %p140, %p141
    %p143 = scmp.ne.s32.totalorder %s134, %s135
    %p144 = scmp.eq.s32.totalorder %s36, 0
    %p145 = por %p143, %p144
    %p146 = scmp.ne.s32.totalorder %s134, %s135
    %p147 = scmp.eq.s32.totalorder %s37, 3
    %p148 = por %p146, %p147
    %p150 = scmp.ne.s32.totalorder %s135, %s149
    %p151 = scmp.eq.s32.totalorder %s37, 0
    %p152 = por %p150, %p151
    %s154 = sadd.s32 %s153, 1
    %p157 = scmp.eq.s32.totalorder %s31, 3
    %p158 = scmp.ne.s32.totalorder %s153, %s155
    %p159 = scmp.eq.s32.totalorder %s31, 0
    %p160 = por %p158, %p159
    %p161 = scmp.ne.s32.totalorder %s153, %s155
    %p162 = scmp.eq.s32.totalorder %s36, 3
    %p163 = por %p161, %p162
    %p164 = scmp.ne.s32.totalorder %s155, %s156
    %p165 = scmp.eq.s32.totalorder %s36, 0
    %p166 = por %p164, %p165
    %p167 = scmp.ne.s32.totalorder %s155, %s156
    %p168 = scmp.eq.s32.totalorder %s37, 3
    %p169 = por %p167, %p168
    %p171 = scmp.ne.s32.totalorder %s156, %s170
    %p172 = scmp.eq.s32.totalorder %s37, 0
    %p173 = por %p171, %p172
    %s175 = sadd.s32 %s174, 1
    %p178 = scmp.eq.s32.totalorder %s31, 3
    %p179 = scmp.ne.s32.totalorder %s174, %s176
    %p180 = scmp.eq.s32.totalorder %s31, 0
    %p181 = por %p179, %p180
    %p182 = scmp.ne.s32.totalorder %s174, %s176
    %p183 = scmp.eq.s32.totalorder %s36, 3
    %p184 = por %p182, %p183
    %p185 = scmp.ne.s32.totalorder %s176, %s177
    %p186 = scmp.eq.s32.totalorder %s36, 0
    %p187 = por %p185, %p186
    %p188 = scmp.ne.s32.totalorder %s176, %s177
    %p189 = scmp.eq.s32.totalorder %s37, 3
    %p190 = por %p188, %p189
    %p192 = scmp.ne.s32.totalorder %s177, %s191
    %p193 = scmp.eq.s32.totalorder %s37, 0
    %p194 = por %p192, %p193
    %s195 = ssub.s32 %s38, %s50
    %p196 = scmp.eq.s32.totalorder %s195, 0
    %s198 = sadd.s32 %s197, 1
    %s199 = scalar_select %p196, %s197, %s198
    %p202 = pneg %p196
    %p203 = scmp.eq.s32.totalorder %s31, 3
    %p204 = por %p202, %p203
    %p205 = scmp.ne.s32.totalorder %s197, %s200
    %p206 = scmp.eq.s32.totalorder %s31, 0
    %p207 = por %p205, %p206
    %p208 = scmp.ne.s32.totalorder %s197, %s200
    %p209 = scmp.eq.s32.totalorder %s36, 3
    %p210 = por %p208, %p209
    %p211 = scmp.ne.s32.totalorder %s200, %s201
    %p212 = scmp.eq.s32.totalorder %s36, 0
    %p213 = por %p211, %p212
    %p214 = scmp.ne.s32.totalorder %s200, %s201
    %p215 = scmp.eq.s32.totalorder %s37, 3
    %p216 = por %p214, %p215
    %p218 = scmp.ne.s32.totalorder %s201, %s217
    %p219 = scmp.eq.s32.totalorder %s37, 0
    %p220 = por %p218, %p219
    %s221 = ssub.s32 %s38, %s50
    %p222 = scmp.eq.s32.totalorder %s221, 0
    %s224 = sadd.s32 %s223, 1
    %s225 = scalar_select %p222, %s223, %s224
    %p228 = pneg %p222
    %p229 = scmp.eq.s32.totalorder %s31, 3
    %p230 = por %p228, %p229
    %p231 = scmp.ne.s32.totalorder %s223, %s226
    %p232 = scmp.eq.s32.totalorder %s31, 0
    %p233 = por %p231, %p232
    %p234 = scmp.ne.s32.totalorder %s223, %s226
    %p235 = scmp.eq.s32.totalorder %s36, 3
    %p236 = por %p234, %p235
    %p237 = scmp.ne.s32.totalorder %s226, %s227
    %p238 = scmp.eq.s32.totalorder %s36, 0
    %p239 = por %p237, %p238
    %p240 = scmp.ne.s32.totalorder %s226, %s227
    %p241 = scmp.eq.s32.totalorder %s37, 3
    %p242 = por %p240, %p241
    %p244 = scmp.ne.s32.totalorder %s227, %s243
    %p245 = scmp.eq.s32.totalorder %s37, 0
    %p246 = por %p244, %p245
    %p247 = scmp.le.s32.totalorder 1, %s31
    %p248 = scmp.lt.s32.totalorder %s31, 5
    %p249 = pnand %p247, %p248
    %p250 = pneg %p249
    // Predicated region
    $region9: #{mlpnet_forward.1} parent=5 // pred_check
      _
    $region10: #{mlpnet_forward.1} parent=5 // pred_check_branch
      %252 = sbr.rel (%p249) target = $region12
    $region11: #{mlpnet_forward.1} parent=5 // pred_region
      %s253 = ssub.s32 %s31, 1
      // Predicated region
      $region13: #{mlpnet_forward.1} parent=11 // pred_check
        %p254 = pneg %p124
      $region14: #{mlpnet_forward.1} parent=11 // pred_check_branch
        %256 = sbr.rel (%p254) target = $region16
      $region15: #{mlpnet_forward.1} parent=11 // pred_region
        _
      $region16: #{mlpnet_forward.1} parent=11 // pred_fallthru
        _
      // Predicated region
      $region17: #{mlpnet_forward.1} parent=11 // pred_check
        %p257 = pneg %p145
      $region18: #{mlpnet_forward.1} parent=11 // pred_check_branch
        %259 = sbr.rel (%p257) target = $region20
      $region19: #{mlpnet_forward.1} parent=11 // pred_region
        _
      $region20: #{mlpnet_forward.1} parent=11 // pred_fallthru
        _
      // Predicated region
      $region21: #{mlpnet_forward.1} parent=11 // pred_check
        %p260 = pneg %p166
      $region22: #{mlpnet_forward.1} parent=11 // pred_check_branch
        %262 = sbr.rel (%p260) target = $region24
      $region23: #{mlpnet_forward.1} parent=11 // pred_region
        _
      $region24: #{mlpnet_forward.1} parent=11 // pred_fallthru
        _
      // Predicated region
      $region25: #{mlpnet_forward.1} parent=11 // pred_check
        %p263 = pneg %p187
      $region26: #{mlpnet_forward.1} parent=11 // pred_check_branch
        %265 = sbr.rel (%p263) target = $region28
      $region27: #{mlpnet_forward.1} parent=11 // pred_region
        _
      $region28: #{mlpnet_forward.1} parent=11 // pred_fallthru
        _
    $region12: #{mlpnet_forward.1} parent=5 // pred_fallthru
      _
    %p266 = scmp.lt.s32.totalorder %s31, 4
    // Predicated region
    $region29: #{mlpnet_forward.1} parent=5 // pred_check
      %p267 = pneg %p266
    $region30: #{mlpnet_forward.1} parent=5 // pred_check_branch
      %269 = sbr.rel (%p267) target = $region32
    $region31: #{mlpnet_forward.1} parent=5 // pred_region
      // Predicated region
      $region33: #{mlpnet_forward.1} parent=31 // pred_check
        %p270 = pneg %p67
      $region34: #{mlpnet_forward.1} parent=31 // pred_check_branch
        %272 = sbr.rel (%p270) target = $region36
      $region35: #{mlpnet_forward.1} parent=31 // pred_region
        %s273 = smul.u32 %s38, 2
        %s274 = sadd.s32 %s273, %s39
        %s275 = smul.u32 32, %s274
        %p276 = scmp.lt.s32.totalorder %s275, 127
        %s277 = scalar_select %p276, %s275, 127
        %s278 = smul.addr %s277, 4
        %s279 = scalar_lea.vmem %s3, %s278
        %s280 = smul.u32 %s38, 2
        %s281 = sadd.s32 %s280, %s39
        %s282 = smul.u32 32, %s281
      $region36: #{mlpnet_forward.1} parent=31 // pred_fallthru
        _
      // Predicated region
      $region37: #{mlpnet_forward.1} parent=31 // pred_check
        %p283 = pneg %p97
      $region38: #{mlpnet_forward.1} parent=31 // pred_check_branch
        %285 = sbr.rel (%p283) target = $region40
      $region39: #{mlpnet_forward.1} parent=31 // pred_region
        %s286 = smul.u32 %s38, 2
        %s287 = sadd.s32 %s286, %s39
        %s288 = smul.u32 2, %s287
        %p289 = scmp.lt.s32.totalorder %s288, 7
        %s290 = scalar_select %p289, %s288, 7
        %s291 = scalar_lea.vmem %s4, %s290
        %s292 = smul.u32 %s38, 2
        %s293 = sadd.s32 %s292, %s39
        %s294 = smul.u32 2, %s293
      $region40: #{mlpnet_forward.1} parent=31 // pred_fallthru
        _
    $region32: #{mlpnet_forward.1} parent=5 // pred_fallthru
      _
    %p295 = scmp.le.s32.totalorder 1, %s31
    %p296 = scmp.lt.s32.totalorder %s31, 5
    %p297 = pnand %p295, %p296
    %p298 = pneg %p297
    // Predicated region
    $region41: #{mlpnet_forward.1} parent=5 // pred_check
      _
    $region42: #{mlpnet_forward.1} parent=5 // pred_check_branch
      %300 = sbr.rel (%p297) target = $region44
    $region43: #{mlpnet_forward.1} parent=5 // pred_region
      %s301 = ssub.s32 %s31, 1
      %s302 = smul.u32 %s40, 2
      %s303 = sadd.s32 %s302, %s41
      %s304 = smul.u32 32, %s303
      %p305 = scmp.lt.s32.totalorder %s304, 127
      %s306 = scalar_select %p305, %s304, 127
      %s307 = smul.addr %s306, 4
      %s308 = scalar_lea.vmem %s3, %s307
      %p309 = pneg %p73
      %p310 = pneg %p70
      %s311 = smul.u32 %s40, 2
      %s312 = sadd.s32 %s311, %s41
      %s313 = smul.u32 2, %s312
      %p314 = scmp.lt.s32.totalorder %s313, 7
      %s315 = scalar_select %p314, %s313, 7
      %s316 = scalar_lea.vmem %s4, %s315
      %p317 = pneg %p103
      %p318 = pneg %p100
      %p319 = pneg %p124
      %p320 = pneg %p121
      %p321 = pneg %p145
      %p322 = pneg %p142
      %p323 = pneg %p166
      %p324 = pneg %p163
      %p325 = pneg %p187
      %p326 = pneg %p184
      %p327 = pneg %p213
      %p328 = pneg %p210
      %p329 = scmp.lt.s32.totalorder %s40, 1
      %s330 = scalar_select %p329, %s40, 1
      %s331 = smul.addr %s330, 2
      %s332 = smul.addr %s331, 4
      %s333 = scalar_lea.vmem %s9, %s332
      %p334 = pneg %p239
      %p335 = pneg %p236
      %p336 = scmp.lt.s32.totalorder %s40, 1
      %s337 = scalar_select %p336, %s40, 1
      %s338 = smul.addr %s337, 2
      %s339 = smul.addr %s338, 4
      %s340 = scalar_lea.vmem %s10, %s339
      %s341 = smul.u32 %s40, 2
      %s342 = sadd.s32 %s341, %s41
      %s343 = smul.u32 32, %s342
      %p344 = scmp.lt.s32.totalorder %s343, 127
      %s345 = scalar_select %p344, %s343, 127
      %s346 = smul.addr %s345, 4
      %s347 = scalar_lea.vmem %s3, %s346
      %s348 = smul.u32 %s40, 2
      %s349 = sadd.s32 %s348, %s41
      %s350 = smul.u32 32, %s349
      %s351 = smul.u32 %s40, 2
      %s352 = sadd.s32 %s351, %s41
      %s353 = smul.u32 2, %s352
      %p354 = scmp.lt.s32.totalorder %s353, 7
      %s355 = scalar_select %p354, %s353, 7
      %s356 = scalar_lea.vmem %s4, %s355
      %s357 = smul.u32 %s40, 2
      %s358 = sadd.s32 %s357, %s41
      %s359 = smul.u32 2, %s358
      %p360 = scmp.lt.s32.totalorder %s40, 1
      %s361 = scalar_select %p360, %s40, 1
      %s362 = smul.addr %s361, 2
      %s363 = smul.addr %s362, 4
      %s364 = scalar_lea.vmem %s9, %s363
      %p365 = scmp.lt.s32.totalorder %s40, 1
      %s366 = scalar_select %p365, %s40, 1
      %s367 = smul.addr %s366, 2
      %s368 = smul.addr %s367, 4
      %s369 = scalar_lea.vmem %s10, %s368
      %s371 = smul.u32 %s40, 2
      %s372 = sadd.s32 %s371, %s41
      %s373 = smul.u32 %s372, 256
      %p374 = scmp.eq.s32.totalorder %s41, 0
      // Predicated region
      $region45: #{mlpnet_forward.1} parent=43 // pred_check
        %p375 = pneg %p374
      $region46: #{mlpnet_forward.1} parent=43 // pred_check_branch
        %377 = sbr.rel (%p375) target = $region48
      $region47: #{mlpnet_forward.1} parent=43 // pred_region
        %378 = vst [vmem:[%s364] sm:$0xff] 0.0
        %379 = vst [vmem:[%s369] sm:$0xff] -1e+30
      $region48: #{mlpnet_forward.1} parent=43 // pred_fallthru
        _
      %v380 = vld [vmem:[%s347] sm:$0xf]
      %v381 = vld [vmem:[%s347 + $0x4] sm:$0xf]
      %v382 = vld [vmem:[%s347 + $0x8] sm:$0xf]
      %v383 = vld [vmem:[%s347 + $0xc] sm:$0xf]
      %v384 = vld [vmem:[%s347 + $0x10] sm:$0xf]
      %v385 = vld [vmem:[%s347 + $0x14] sm:$0xf]
      %v386 = vld [vmem:[%s347 + $0x18] sm:$0xf]
      %v387 = vld [vmem:[%s347 + $0x1c] sm:$0xf]
      %v388 = vld [vmem:[%s347 + $0x20] sm:$0xf]
      %v389 = vld [vmem:[%s347 + $0x24] sm:$0xf]
      %v390 = vld [vmem:[%s347 + $0x28] sm:$0xf]
      %v391 = vld [vmem:[%s347 + $0x2c] sm:$0xf]
      %v392 = vld [vmem:[%s347 + $0x30] sm:$0xf]
      %v393 = vld [vmem:[%s347 + $0x34] sm:$0xf]
      %v394 = vld [vmem:[%s347 + $0x38] sm:$0xf]
      %v395 = vld [vmem:[%s347 + $0x3c] sm:$0xf]
      %v396 = vld [vmem:[%s347 + $0x40] sm:$0xf]
      %v397 = vld [vmem:[%s347 + $0x44] sm:$0xf]
      %v398 = vld [vmem:[%s347 + $0x48] sm:$0xf]
      %v399 = vld [vmem:[%s347 + $0x4c] sm:$0xf]
      %v400 = vld [vmem:[%s347 + $0x50] sm:$0xf]
      %v401 = vld [vmem:[%s347 + $0x54] sm:$0xf]
      %v402 = vld [vmem:[%s347 + $0x58] sm:$0xf]
      %v403 = vld [vmem:[%s347 + $0x5c] sm:$0xf]
      %v404 = vld [vmem:[%s347 + $0x60] sm:$0xf]
      %v405 = vld [vmem:[%s347 + $0x64] sm:$0xf]
      %v406 = vld [vmem:[%s347 + $0x68] sm:$0xf]
      %v407 = vld [vmem:[%s347 + $0x6c] sm:$0xf]
      %v408 = vld [vmem:[%s347 + $0x70] sm:$0xf]
      %v409 = vld [vmem:[%s347 + $0x74] sm:$0xf]
      %v410 = vld [vmem:[%s347 + $0x78] sm:$0xf]
      %v411 = vld [vmem:[%s347 + $0x7c] sm:$0xf]
      %v412 = vld [vmem:[%s5] sm:$0xff]
      %v413 = vld [vmem:[%s6] sm:$0x3]
      %v415 = vlaneseq
      %v416 = vshrl.u32 %v415, 7
      %v417 = vsub.s32 0, %v416
      %v418 = vrot.slane %v413, %v417
      %v419 = vlaneseq
      %v420 = vshrl.u32 %v419, 7
      %v421 = vsub.s32 1, %v420
      %v422 = vrot.slane %v413, %v421
      %v457 = vunpack.c.l.b16 %v380
      %v458 = vunpack.c.l.b16 %v381
      %v459 = vunpack.c.l.b16 %v382
      %v460 = vunpack.c.l.b16 %v383
      %v461 = vunpack.c.l.b16 %v384
      %v462 = vunpack.c.l.b16 %v385
      %v463 = vunpack.c.l.b16 %v386
      %v464 = vunpack.c.l.b16 %v387
      %v465 = vunpack.c.l.b16 %v388
      %v466 = vunpack.c.l.b16 %v389
      %v467 = vunpack.c.l.b16 %v390
      %v468 = vunpack.c.l.b16 %v391
      %v469 = vunpack.c.l.b16 %v392
      %v470 = vunpack.c.l.b16 %v393
      %v471 = vunpack.c.l.b16 %v394
      %v472 = vunpack.c.l.b16 %v395
      %v473 = vunpack.c.l.b16 %v396
      %v474 = vunpack.c.l.b16 %v397
      %v475 = vunpack.c.l.b16 %v398
      %v476 = vunpack.c.l.b16 %v399
      %v477 = vunpack.c.l.b16 %v400
      %v478 = vunpack.c.l.b16 %v401
      %v479 = vunpack.c.l.b16 %v402
      %v480 = vunpack.c.l.b16 %v403
      %v481 = vunpack.c.l.b16 %v404
      %v482 = vunpack.c.l.b16 %v405
      %v483 = vunpack.c.l.b16 %v406
      %v484 = vunpack.c.l.b16 %v407
      %v485 = vunpack.c.l.b16 %v408
      %v486 = vunpack.c.l.b16 %v409
      %v487 = vunpack.c.l.b16 %v410
      %v488 = vunpack.c.l.b16 %v411
      %v489 = vpack.c.b16 %v458, %v457
      %v490 = vpack.c.b16 %v460, %v459
      %v491 = vpack.c.b16 %v462, %v461
      %v492 = vpack.c.b16 %v464, %v463
      %v493 = vpack.c.b16 %v466, %v465
      %v494 = vpack.c.b16 %v468, %v467
      %v495 = vpack.c.b16 %v470, %v469
      %v496 = vpack.c.b16 %v472, %v471
      %v497 = vpack.c.b16 %v474, %v473
      %v498 = vpack.c.b16 %v476, %v475
      %v499 = vpack.c.b16 %v478, %v477
      %v500 = vpack.c.b16 %v480, %v479
      %v501 = vpack.c.b16 %v482, %v481
      %v502 = vpack.c.b16 %v484, %v483
      %v503 = vpack.c.b16 %v486, %v485
      %v504 = vpack.c.b16 %v488, %v487
      %v506 = vunpack.c.l.b16 %v412
      %v507 = vunpack.c.h.b16 %v412
      %v508 = vpack.c.b16 %v506, %v506
      %v509 = vpack.c.b16 %v507, %v507
      %vm510 = vcmask 64512
      %v512 = vsel %vm510, %v489, 0
      %v515 = vsel %vm510, %v490, 0
      %v518 = vsel %vm510, %v491, 0
      %v521 = vsel %vm510, %v492, 0
      %v524 = vsel %vm510, %v493, 0
      %v527 = vsel %vm510, %v494, 0
      %v530 = vsel %vm510, %v495, 0
      %v533 = vsel %vm510, %v496, 0
      %v536 = vsel %vm510, %v497, 0
      %v539 = vsel %vm510, %v498, 0
      %v542 = vsel %vm510, %v499, 0
      %v545 = vsel %vm510, %v500, 0
      %v548 = vsel %vm510, %v501, 0
      %v551 = vsel %vm510, %v502, 0
      %v554 = vsel %vm510, %v503, 0
      %v557 = vsel %vm510, %v504, 0
      %vm559 = vcmask 1043456
      %v561 = vsel %vm559, %v508, 0
      %v564 = vsel %vm559, %v509, 0
      %566 = vmatprep.subr.bf16.mxu0 0
      %567 = vmatpush1.bf16.msra.mxu0 0
      %568 = vmatprep.subr.bf16.mxu0 0
      %569 = vmatpush1.bf16.msra.mxu0 0
      %570 = vmatprep.subr.bf16.mxu0 0
      %571 = vmatpush1.bf16.msra.mxu0 0
      %572 = vmatprep.subr.bf16.mxu0 0
      %573 = vmatpush1.bf16.msra.mxu0 0
      %574 = vmatprep.subr.bf16.mxu0 0
      %575 = vmatpush1.bf16.msra.mxu0 0
      %576 = vmatprep.subr.bf16.mxu0 0
      %577 = vmatpush1.bf16.msra.mxu0 0
      %578 = vmatprep.subr.bf16.mxu0 0
      %579 = vmatpush1.bf16.msra.mxu0 0
      %580 = vmatprep.subr.bf16.mxu0 %v564
      %581 = vmatpush1.bf16.msra.mxu0 %v561
      %582 = vmatprep.subr.bf16.mxu0 0
      %583 = vmatpush2.bf16.msra.mxu0 0
      %584 = vmatprep.subr.bf16.mxu0 0
      %585 = vmatpush2.bf16.msra.mxu0 0
      %586 = vmatprep.subr.bf16.mxu0 0
      %587 = vmatpush2.bf16.msra.mxu0 0
      %588 = vmatprep.subr.bf16.mxu0 0
      %589 = vmatpush2.bf16.msra.mxu0 0
      %590 = vmatprep.subr.bf16.mxu0 0
      %591 = vmatpush2.bf16.msra.mxu0 0
      %592 = vmatprep.subr.bf16.mxu0 0
      %593 = vmatpush2.bf16.msra.mxu0 0
      %594 = vmatprep.subr.bf16.mxu0 0
      %595 = vmatpush2.bf16.msra.mxu0 0
      %596 = vmatprep.subr.bf16.mxu0 0
      %597 = vmatpush2.bf16.msra.mxu0 0
      %598 = vmatprep.mubr.bf16.mxu0 0
      %599 = vmatmul.mubr.bf16.gmra.mxu0 %v512
      %v600 = vpop.f32.mrf.mxu0
      %v601 = vadd.f32 %v418, %v600
      %v602 = vpop.f32.mrf.mxu0
      %v603 = vadd.f32 %v422, %v602
      %v604 = vpop.f32.mrf.mxu0
      %v605 = vadd.f32 %v418, %v604
      %v606 = vpop.f32.mrf.mxu0
      %v607 = vadd.f32 %v422, %v606
      %608 = vmatprep.mubr.bf16.mxu0 0
      %609 = vmatmul.mubr.bf16.gmra.mxu0 %v515
      %v610 = vpop.f32.mrf.mxu0
      %v611 = vadd.f32 %v418, %v610
      %v612 = vpop.f32.mrf.mxu0
      %v613 = vadd.f32 %v422, %v612
      %v614 = vpop.f32.mrf.mxu0
      %v615 = vadd.f32 %v418, %v614
      %v616 = vpop.f32.mrf.mxu0
      %v617 = vadd.f32 %v422, %v616
      %618 = vmatprep.mubr.bf16.mxu0 0
      %619 = vmatmul.mubr.bf16.gmra.mxu0 %v518
      %v620 = vpop.f32.mrf.mxu0
      %v621 = vadd.f32 %v418, %v620
      %v622 = vpop.f32.mrf.mxu0
      %v623 = vadd.f32 %v422, %v622
      %v624 = vpop.f32.mrf.mxu0
      %v625 = vadd.f32 %v418, %v624
      %v626 = vpop.f32.mrf.mxu0
      %v627 = vadd.f32 %v422, %v626
      %628 = vmatprep.mubr.bf16.mxu0 0
      %629 = vmatmul.mubr.bf16.gmra.mxu0 %v521
      %v630 = vpop.f32.mrf.mxu0
      %v631 = vadd.f32 %v418, %v630
      %v632 = vpop.f32.mrf.mxu0
      %v633 = vadd.f32 %v422, %v632
      %v634 = vpop.f32.mrf.mxu0
      %v635 = vadd.f32 %v418, %v634
      %v636 = vpop.f32.mrf.mxu0
      %v637 = vadd.f32 %v422, %v636
      %638 = vmatprep.mubr.bf16.mxu0 0
      %639 = vmatmul.mubr.bf16.gmra.mxu0 %v524
      %v640 = vpop.f32.mrf.mxu0
      %v641 = vadd.f32 %v418, %v640
      %v642 = vpop.f32.mrf.mxu0
      %v643 = vadd.f32 %v422, %v642
      %v644 = vpop.f32.mrf.mxu0
      %v645 = vadd.f32 %v418, %v644
      %v646 = vpop.f32.mrf.mxu0
      %v647 = vadd.f32 %v422, %v646
      %648 = vmatprep.mubr.bf16.mxu0 0
      %649 = vmatmul.mubr.bf16.gmra.mxu0 %v527
      %v650 = vpop.f32.mrf.mxu0
      %v651 = vadd.f32 %v418, %v650
      %v652 = vpop.f32.mrf.mxu0
      %v653 = vadd.f32 %v422, %v652
      %v654 = vpop.f32.mrf.mxu0
      %v655 = vadd.f32 %v418, %v654
      %v656 = vpop.f32.mrf.mxu0
      %v657 = vadd.f32 %v422, %v656
      %658 = vmatprep.mubr.bf16.mxu0 0
      %659 = vmatmul.mubr.bf16.gmra.mxu0 %v530
      %v660 = vpop.f32.mrf.mxu0
      %v661 = vadd.f32 %v418, %v660
      %v662 = vpop.f32.mrf.mxu0
      %v663 = vadd.f32 %v422, %v662
      %v664 = vpop.f32.mrf.mxu0
      %v665 = vadd.f32 %v418, %v664
      %v666 = vpop.f32.mrf.mxu0
      %v667 = vadd.f32 %v422, %v666
      %668 = vmatprep.mubr.bf16.mxu0 0
      %669 = vmatmul.mubr.bf16.gmra.mxu0 %v533
      %v670 = vpop.f32.mrf.mxu0
      %v671 = vadd.f32 %v418, %v670
      %v672 = vpop.f32.mrf.mxu0
      %v673 = vadd.f32 %v422, %v672
      %v674 = vpop.f32.mrf.mxu0
      %v675 = vadd.f32 %v418, %v674
      %v676 = vpop.f32.mrf.mxu0
      %v677 = vadd.f32 %v422, %v676
      %678 = vmatprep.mubr.bf16.mxu0 0
      %679 = vmatmul.mubr.bf16.gmra.mxu0 %v536
      %v680 = vpop.f32.mrf.mxu0
      %v681 = vadd.f32 %v418, %v680
      %v682 = vpop.f32.mrf.mxu0
      %v683 = vadd.f32 %v422, %v682
      %v684 = vpop.f32.mrf.mxu0
      %v685 = vadd.f32 %v418, %v684
      %v686 = vpop.f32.mrf.mxu0
      %v687 = vadd.f32 %v422, %v686
      %688 = vmatprep.mubr.bf16.mxu0 0
      %689 = vmatmul.mubr.bf16.gmra.mxu0 %v539
      %v690 = vpop.f32.mrf.mxu0
      %v691 = vadd.f32 %v418, %v690
      %v692 = vpop.f32.mrf.mxu0
      %v693 = vadd.f32 %v422, %v692
      %v694 = vpop.f32.mrf.mxu0
      %v695 = vadd.f32 %v418, %v694
      %v696 = vpop.f32.mrf.mxu0
      %v697 = vadd.f32 %v422, %v696
      %698 = vmatprep.mubr.bf16.mxu0 0
      %699 = vmatmul.mubr.bf16.gmra.mxu0 %v542
      %v700 = vpop.f32.mrf.mxu0
      %v701 = vadd.f32 %v418, %v700
      %v702 = vpop.f32.mrf.mxu0
      %v703 = vadd.f32 %v422, %v702
      %v704 = vpop.f32.mrf.mxu0
      %v705 = vadd.f32 %v418, %v704
      %v706 = vpop.f32.mrf.mxu0
      %v707 = vadd.f32 %v422, %v706
      %708 = vmatprep.mubr.bf16.mxu0 0
      %709 = vmatmul.mubr.bf16.gmra.mxu0 %v545
      %v710 = vpop.f32.mrf.mxu0
      %v711 = vadd.f32 %v418, %v710
      %v712 = vpop.f32.mrf.mxu0
      %v713 = vadd.f32 %v422, %v712
      %v714 = vpop.f32.mrf.mxu0
      %v715 = vadd.f32 %v418, %v714
      %v716 = vpop.f32.mrf.mxu0
      %v717 = vadd.f32 %v422, %v716
      %718 = vmatprep.mubr.bf16.mxu0 0
      %719 = vmatmul.mubr.bf16.gmra.mxu0 %v548
      %v720 = vpop.f32.mrf.mxu0
      %v721 = vadd.f32 %v418, %v720
      %v722 = vpop.f32.mrf.mxu0
      %v723 = vadd.f32 %v422, %v722
      %v724 = vpop.f32.mrf.mxu0
      %v725 = vadd.f32 %v418, %v724
      %v726 = vpop.f32.mrf.mxu0
      %v727 = vadd.f32 %v422, %v726
      %728 = vmatprep.mubr.bf16.mxu0 0
      %729 = vmatmul.mubr.bf16.gmra.mxu0 %v551
      %v730 = vpop.f32.mrf.mxu0
      %v731 = vadd.f32 %v418, %v730
      %v732 = vpop.f32.mrf.mxu0
      %v733 = vadd.f32 %v422, %v732
      %v734 = vpop.f32.mrf.mxu0
      %v735 = vadd.f32 %v418, %v734
      %v736 = vpop.f32.mrf.mxu0
      %v737 = vadd.f32 %v422, %v736
      %738 = vmatprep.mubr.bf16.mxu0 0
      %739 = vmatmul.mubr.bf16.gmra.mxu0 %v554
      %v740 = vpop.f32.mrf.mxu0
      %v741 = vadd.f32 %v418, %v740
      %v742 = vpop.f32.mrf.mxu0
      %v743 = vadd.f32 %v422, %v742
      %v744 = vpop.f32.mrf.mxu0
      %v745 = vadd.f32 %v418, %v744
      %v746 = vpop.f32.mrf.mxu0
      %v747 = vadd.f32 %v422, %v746
      %748 = vmatprep.mubr.bf16.mxu0 0
      %749 = vmatmul.mubr.bf16.gmra.mxu0 %v557
      %v750 = vpop.f32.mrf.mxu0
      %v751 = vadd.f32 %v418, %v750
      %v752 = vpop.f32.mrf.mxu0
      %v753 = vadd.f32 %v422, %v752
      %v754 = vpop.f32.mrf.mxu0
      %v755 = vadd.f32 %v418, %v754
      %v756 = vpop.f32.mrf.mxu0
      %v757 = vadd.f32 %v422, %v756
      %758 = vdwg.mxu0
      %v759 = vmax.f32 %v601, 0.0
      %v760 = vmax.f32 %v603, 0.0
      %v761 = vmax.f32 %v605, 0.0
      %v762 = vmax.f32 %v607, 0.0
      %v763 = vmax.f32 %v611, 0.0
      %v764 = vmax.f32 %v613, 0.0
      %v765 = vmax.f32 %v615, 0.0
      %v766 = vmax.f32 %v617, 0.0
      %v767 = vmax.f32 %v621, 0.0
      %v768 = vmax.f32 %v623, 0.0
      %v769 = vmax.f32 %v625, 0.0
      %v770 = vmax.f32 %v627, 0.0
      %v771 = vmax.f32 %v631, 0.0
      %v772 = vmax.f32 %v633, 0.0
      %v773 = vmax.f32 %v635, 0.0
      %v774 = vmax.f32 %v637, 0.0
      %v775 = vmax.f32 %v641, 0.0
      %v776 = vmax.f32 %v643, 0.0
      %v777 = vmax.f32 %v645, 0.0
      %v778 = vmax.f32 %v647, 0.0
      %v779 = vmax.f32 %v651, 0.0
      %v780 = vmax.f32 %v653, 0.0
      %v781 = vmax.f32 %v655, 0.0
      %v782 = vmax.f32 %v657, 0.0
      %v783 = vmax.f32 %v661, 0.0
      %v784 = vmax.f32 %v663, 0.0
      %v785 = vmax.f32 %v665, 0.0
      %v786 = vmax.f32 %v667, 0.0
      %v787 = vmax.f32 %v671, 0.0
      %v788 = vmax.f32 %v673, 0.0
      %v789 = vmax.f32 %v675, 0.0
      %v790 = vmax.f32 %v677, 0.0
      %v791 = vmax.f32 %v681, 0.0
      %v792 = vmax.f32 %v683, 0.0
      %v793 = vmax.f32 %v685, 0.0
      %v794 = vmax.f32 %v687, 0.0
      %v795 = vmax.f32 %v691, 0.0
      %v796 = vmax.f32 %v693, 0.0
      %v797 = vmax.f32 %v695, 0.0
      %v798 = vmax.f32 %v697, 0.0
      %v799 = vmax.f32 %v701, 0.0
      %v800 = vmax.f32 %v703, 0.0
      %v801 = vmax.f32 %v705, 0.0
      %v802 = vmax.f32 %v707, 0.0
      %v803 = vmax.f32 %v711, 0.0
      %v804 = vmax.f32 %v713, 0.0
      %v805 = vmax.f32 %v715, 0.0
      %v806 = vmax.f32 %v717, 0.0
      %v807 = vmax.f32 %v721, 0.0
      %v808 = vmax.f32 %v723, 0.0
      %v809 = vmax.f32 %v725, 0.0
      %v810 = vmax.f32 %v727, 0.0
      %v811 = vmax.f32 %v731, 0.0
      %v812 = vmax.f32 %v733, 0.0
      %v813 = vmax.f32 %v735, 0.0
      %v814 = vmax.f32 %v737, 0.0
      %v815 = vmax.f32 %v741, 0.0
      %v816 = vmax.f32 %v743, 0.0
      %v817 = vmax.f32 %v745, 0.0
      %v818 = vmax.f32 %v747, 0.0
      %v819 = vmax.f32 %v751, 0.0
      %v820 = vmax.f32 %v753, 0.0
      %v821 = vmax.f32 %v755, 0.0
      %v822 = vmax.f32 %v757, 0.0
      %v823 = vpack.c.bf16 %v761, %v759
      %v824 = vpack.c.bf16 %v762, %v760
      %v825 = vpack.c.bf16 %v765, %v763
      %v826 = vpack.c.bf16 %v766, %v764
      %v827 = vpack.c.bf16 %v769, %v767
      %v828 = vpack.c.bf16 %v770, %v768
      %v829 = vpack.c.bf16 %v773, %v771
      %v830 = vpack.c.bf16 %v774, %v772
      %v831 = vpack.c.bf16 %v777, %v775
      %v832 = vpack.c.bf16 %v778, %v776
      %v833 = vpack.c.bf16 %v781, %v779
      %v834 = vpack.c.bf16 %v782, %v780
      %v835 = vpack.c.bf16 %v785, %v783
      %v836 = vpack.c.bf16 %v786, %v784
      %v837 = vpack.c.bf16 %v789, %v787
      %v838 = vpack.c.bf16 %v790, %v788
      %v839 = vpack.c.bf16 %v793, %v791
      %v840 = vpack.c.bf16 %v794, %v792
      %v841 = vpack.c.bf16 %v797, %v795
      %v842 = vpack.c.bf16 %v798, %v796
      %v843 = vpack.c.bf16 %v801, %v799
      %v844 = vpack.c.bf16 %v802, %v800
      %v845 = vpack.c.bf16 %v805, %v803
      %v846 = vpack.c.bf16 %v806, %v804
      %v847 = vpack.c.bf16 %v809, %v807
      %v848 = vpack.c.bf16 %v810, %v808
      %v849 = vpack.c.bf16 %v813, %v811
      %v850 = vpack.c.bf16 %v814, %v812
      %v851 = vpack.c.bf16 %v817, %v815
      %v852 = vpack.c.bf16 %v818, %v816
      %v853 = vpack.c.bf16 %v821, %v819
      %v854 = vpack.c.bf16 %v822, %v820
      %v855 = vld [vmem:[%s7] sm:$0xff]
      %v856 = vld [vmem:[%s7 + $0x8] sm:$0xff]
      %v857 = vld [vmem:[%s7 + $0x10] sm:$0xff]
      %v858 = vld [vmem:[%s7 + $0x18] sm:$0xff]
      %v859 = vld [vmem:[%s7 + $0x20] sm:$0xff]
      %v860 = vld [vmem:[%s7 + $0x28] sm:$0xff]
      %v861 = vld [vmem:[%s7 + $0x30] sm:$0xff]
      %v862 = vld [vmem:[%s7 + $0x38] sm:$0xff]
      %v863 = vld [vmem:[%s7 + $0x40] sm:$0xff]
      %v864 = vld [vmem:[%s7 + $0x48] sm:$0xff]
      %v865 = vld [vmem:[%s7 + $0x50] sm:$0xff]
      %v866 = vld [vmem:[%s7 + $0x58] sm:$0xff]
      %v867 = vld [vmem:[%s7 + $0x60] sm:$0xff]
      %v868 = vld [vmem:[%s7 + $0x68] sm:$0xff]
      %v869 = vld [vmem:[%s7 + $0x70] sm:$0xff]
      %v870 = vld [vmem:[%s7 + $0x78] sm:$0xff]
      %v871 = vld [vmem:[%s7 + $0x80] sm:$0xff]
      %v872 = vld [vmem:[%s7 + $0x88] sm:$0xff]
      %v873 = vld [vmem:[%s7 + $0x90] sm:$0xff]
      %v874 = vld [vmem:[%s7 + $0x98] sm:$0xff]
      %v875 = vld [vmem:[%s7 + $0xa0] sm:$0xff]
      %v876 = vld [vmem:[%s7 + $0xa8] sm:$0xff]
      %v877 = vld [vmem:[%s7 + $0xb0] sm:$0xff]
      %v878 = vld [vmem:[%s7 + $0xb8] sm:$0xff]
      %v879 = vld [vmem:[%s7 + $0xc0] sm:$0xff]
      %v880 = vld [vmem:[%s7 + $0xc8] sm:$0xff]
      %v881 = vld [vmem:[%s7 + $0xd0] sm:$0xff]
      %v882 = vld [vmem:[%s7 + $0xd8] sm:$0xff]
      %v883 = vld [vmem:[%s7 + $0xe0] sm:$0xff]
      %v884 = vld [vmem:[%s7 + $0xe8] sm:$0xff]
      %v885 = vld [vmem:[%s7 + $0xf0] sm:$0xff]
      %v886 = vld [vmem:[%s7 + $0xf8] sm:$0xff]
      %v887 = vld [vmem:[%s8] sm:$0x3]
      %v889 = vlaneseq
      %v890 = vshrl.u32 %v889, 7
      %v891 = vsub.s32 0, %v890
      %v892 = vrot.slane %v887, %v891
      %v893 = vlaneseq
      %v894 = vshrl.u32 %v893, 7
      %v895 = vsub.s32 1, %v894
      %v896 = vrot.slane %v887, %v895
      %v931 = vunpack.c.l.b16 %v855
      %v932 = vunpack.c.h.b16 %v855
      %v933 = vunpack.c.l.b16 %v856
      %v934 = vunpack.c.h.b16 %v856
      %v935 = vunpack.c.l.b16 %v857
      %v936 = vunpack.c.h.b16 %v857
      %v937 = vunpack.c.l.b16 %v858
      %v938 = vunpack.c.h.b16 %v858
      %v939 = vunpack.c.l.b16 %v859
      %v940 = vunpack.c.h.b16 %v859
      %v941 = vunpack.c.l.b16 %v860
      %v942 = vunpack.c.h.b16 %v860
      %v943 = vunpack.c.l.b16 %v861
      %v944 = vunpack.c.h.b16 %v861
      %v945 = vunpack.c.l.b16 %v862
      %v946 = vunpack.c.h.b16 %v862
      %v947 = vunpack.c.l.b16 %v863
      %v948 = vunpack.c.h.b16 %v863
      %v949 = vunpack.c.l.b16 %v864
      %v950 = vunpack.c.h.b16 %v864
      %v951 = vunpack.c.l.b16 %v865
      %v952 = vunpack.c.h.b16 %v865
      %v953 = vunpack.c.l.b16 %v866
      %v954 = vunpack.c.h.b16 %v866
      %v955 = vunpack.c.l.b16 %v867
      %v956 = vunpack.c.h.b16 %v867
      %v957 = vunpack.c.l.b16 %v868
      %v958 = vunpack.c.h.b16 %v868
      %v959 = vunpack.c.l.b16 %v869
      %v960 = vunpack.c.h.b16 %v869
      %v961 = vunpack.c.l.b16 %v870
      %v962 = vunpack.c.h.b16 %v870
      %v963 = vunpack.c.l.b16 %v871
      %v964 = vunpack.c.h.b16 %v871
      %v965 = vunpack.c.l.b16 %v872
      %v966 = vunpack.c.h.b16 %v872
      %v967 = vunpack.c.l.b16 %v873
      %v968 = vunpack.c.h.b16 %v873
      %v969 = vunpack.c.l.b16 %v874
      %v970 = vunpack.c.h.b16 %v874
      %v971 = vunpack.c.l.b16 %v875
      %v972 = vunpack.c.h.b16 %v875
      %v973 = vunpack.c.l.b16 %v876
      %v974 = vunpack.c.h.b16 %v876
      %v975 = vunpack.c.l.b16 %v877
      %v976 = vunpack.c.h.b16 %v877
      %v977 = vunpack.c.l.b16 %v878
      %v978 = vunpack.c.h.b16 %v878
      %v979 = vunpack.c.l.b16 %v879
      %v980 = vunpack.c.h.b16 %v879
      %v981 = vunpack.c.l.b16 %v880
      %v982 = vunpack.c.h.b16 %v880
      %v983 = vunpack.c.l.b16 %v881
      %v984 = vunpack.c.h.b16 %v881
      %v985 = vunpack.c.l.b16 %v882
      %v986 = vunpack.c.h.b16 %v882
      %v987 = vunpack.c.l.b16 %v883
      %v988 = vunpack.c.h.b16 %v883
      %v989 = vunpack.c.l.b16 %v884
      %v990 = vunpack.c.h.b16 %v884
      %v991 = vunpack.c.l.b16 %v885
      %v992 = vunpack.c.h.b16 %v885
      %v993 = vunpack.c.l.b16 %v886
      %v994 = vunpack.c.h.b16 %v886
      %v995 = vpack.c.b16 %v933, %v931
      %v996 = vpack.c.b16 %v934, %v932
      %v997 = vpack.c.b16 %v937, %v935
      %v998 = vpack.c.b16 %v938, %v936
      %v999 = vpack.c.b16 %v941, %v939
      %v1000 = vpack.c.b16 %v942, %v940
      %v1001 = vpack.c.b16 %v945, %v943
      %v1002 = vpack.c.b16 %v946, %v944
      %v1003 = vpack.c.b16 %v949, %v947
      %v1004 = vpack.c.b16 %v950, %v948
      %v1005 = vpack.c.b16 %v953, %v951
      %v1006 = vpack.c.b16 %v954, %v952
      %v1007 = vpack.c.b16 %v957, %v955
      %v1008 = vpack.c.b16 %v958, %v956
      %v1009 = vpack.c.b16 %v961, %v959
      %v1010 = vpack.c.b16 %v962, %v960
      %v1011 = vpack.c.b16 %v965, %v963
      %v1012 = vpack.c.b16 %v966, %v964
      %v1013 = vpack.c.b16 %v969, %v967
      %v1014 = vpack.c.b16 %v970, %v968
      %v1015 = vpack.c.b16 %v973, %v971
      %v1016 = vpack.c.b16 %v974, %v972
      %v1017 = vpack.c.b16 %v977, %v975
      %v1018 = vpack.c.b16 %v978, %v976
      %v1019 = vpack.c.b16 %v981, %v979
      %v1020 = vpack.c.b16 %v982, %v980
      %v1021 = vpack.c.b16 %v985, %v983
      %v1022 = vpack.c.b16 %v986, %v984
      %v1023 = vpack.c.b16 %v989, %v987
      %v1024 = vpack.c.b16 %v990, %v988
      %v1025 = vpack.c.b16 %v993, %v991
      %v1026 = vpack.c.b16 %v994, %v992
      %1059 = vmatprep.subr.bf16.mxu0 %v1010
      %1060 = vmatpush1.bf16.msra.mxu0 %v1009
      %1061 = vmatprep.subr.bf16.mxu0 %v1008
      %1062 = vmatpush1.bf16.msra.mxu0 %v1007
      %1063 = vmatprep.subr.bf16.mxu0 %v1006
      %1064 = vmatpush1.bf16.msra.mxu0 %v1005
      %1065 = vmatprep.subr.bf16.mxu0 %v1004
      %1066 = vmatpush1.bf16.msra.mxu0 %v1003
      %1067 = vmatprep.subr.bf16.mxu0 %v1002
      %1068 = vmatpush1.bf16.msra.mxu0 %v1001
      %1069 = vmatprep.subr.bf16.mxu0 %v1000
      %1070 = vmatpush1.bf16.msra.mxu0 %v999
      %1071 = vmatprep.subr.bf16.mxu0 %v998
      %1072 = vmatpush1.bf16.msra.mxu0 %v997
      %1073 = vmatprep.subr.bf16.mxu0 %v996
      %1074 = vmatpush1.bf16.msra.mxu0 %v995
      %1075 = vmatprep.subr.bf16.mxu0 %v1026
      %1076 = vmatpush2.bf16.msra.mxu0 %v1025
      %1077 = vmatprep.subr.bf16.mxu0 %v1024
      %1078 = vmatpush2.bf16.msra.mxu0 %v1023
      %1079 = vmatprep.subr.bf16.mxu0 %v1022
      %1080 = vmatpush2.bf16.msra.mxu0 %v1021
      %1081 = vmatprep.subr.bf16.mxu0 %v1020
      %1082 = vmatpush2.bf16.msra.mxu0 %v1019
      %1083 = vmatprep.subr.bf16.mxu0 %v1018
      %1084 = vmatpush2.bf16.msra.mxu0 %v1017
      %1085 = vmatprep.subr.bf16.mxu0 %v1016
      %1086 = vmatpush2.bf16.msra.mxu0 %v1015
      %1087 = vmatprep.subr.bf16.mxu0 %v1014
      %1088 = vmatpush2.bf16.msra.mxu0 %v1013
      %1089 = vmatprep.subr.bf16.mxu0 %v1012
      %1090 = vmatpush2.bf16.msra.mxu0 %v1011
      %1091 = vmatprep.mubr.bf16.mxu0 %v824
      %1092 = vmatmul.mubr.bf16.gmra.mxu0 %v823
      %v1093 = vpop.f32.mrf.mxu0
      %v1094 = vadd.f32 %v892, %v1093
      %v1095 = vpop.f32.mrf.mxu0
      %v1096 = vadd.f32 %v896, %v1095
      %v1097 = vpop.f32.mrf.mxu0
      %v1098 = vadd.f32 %v892, %v1097
      %v1099 = vpop.f32.mrf.mxu0
      %v1100 = vadd.f32 %v896, %v1099
      %1101 = vmatprep.mubr.bf16.mxu0 %v826
      %1102 = vmatmul.mubr.bf16.gmra.mxu0 %v825
      %v1103 = vpop.f32.mrf.mxu0
      %v1104 = vadd.f32 %v892, %v1103
      %v1105 = vpop.f32.mrf.mxu0
      %v1106 = vadd.f32 %v896, %v1105
      %v1107 = vpop.f32.mrf.mxu0
      %v1108 = vadd.f32 %v892, %v1107
      %v1109 = vpop.f32.mrf.mxu0
      %v1110 = vadd.f32 %v896, %v1109
      %1111 = vmatprep.mubr.bf16.mxu0 %v828
      %1112 = vmatmul.mubr.bf16.gmra.mxu0 %v827
      %v1113 = vpop.f32.mrf.mxu0
      %v1114 = vadd.f32 %v892, %v1113
      %v1115 = vpop.f32.mrf.mxu0
      %v1116 = vadd.f32 %v896, %v1115
      %v1117 = vpop.f32.mrf.mxu0
      %v1118 = vadd.f32 %v892, %v1117
      %v1119 = vpop.f32.mrf.mxu0
      %v1120 = vadd.f32 %v896, %v1119
      %1121 = vmatprep.mubr.bf16.mxu0 %v830
      %1122 = vmatmul.mubr.bf16.gmra.mxu0 %v829
      %v1123 = vpop.f32.mrf.mxu0
      %v1124 = vadd.f32 %v892, %v1123
      %v1125 = vpop.f32.mrf.mxu0
      %v1126 = vadd.f32 %v896, %v1125
      %v1127 = vpop.f32.mrf.mxu0
      %v1128 = vadd.f32 %v892, %v1127
      %v1129 = vpop.f32.mrf.mxu0
      %v1130 = vadd.f32 %v896, %v1129
      %1131 = vmatprep.mubr.bf16.mxu0 %v832
      %1132 = vmatmul.mubr.bf16.gmra.mxu0 %v831
      %v1133 = vpop.f32.mrf.mxu0
      %v1134 = vadd.f32 %v892, %v1133
      %v1135 = vpop.f32.mrf.mxu0
      %v1136 = vadd.f32 %v896, %v1135
      %v1137 = vpop.f32.mrf.mxu0
      %v1138 = vadd.f32 %v892, %v1137
      %v1139 = vpop.f32.mrf.mxu0
      %v1140 = vadd.f32 %v896, %v1139
      %1141 = vmatprep.mubr.bf16.mxu0 %v834
      %1142 = vmatmul.mubr.bf16.gmra.mxu0 %v833
      %v1143 = vpop.f32.mrf.mxu0
      %v1144 = vadd.f32 %v892, %v1143
      %v1145 = vpop.f32.mrf.mxu0
      %v1146 = vadd.f32 %v896, %v1145
      %v1147 = vpop.f32.mrf.mxu0
      %v1148 = vadd.f32 %v892, %v1147
      %v1149 = vpop.f32.mrf.mxu0
      %v1150 = vadd.f32 %v896, %v1149
      %1151 = vmatprep.mubr.bf16.mxu0 %v836
      %1152 = vmatmul.mubr.bf16.gmra.mxu0 %v835
      %v1153 = vpop.f32.mrf.mxu0
      %v1154 = vadd.f32 %v892, %v1153
      %v1155 = vpop.f32.mrf.mxu0
      %v1156 = vadd.f32 %v896, %v1155
      %v1157 = vpop.f32.mrf.mxu0
      %v1158 = vadd.f32 %v892, %v1157
      %v1159 = vpop.f32.mrf.mxu0
      %v1160 = vadd.f32 %v896, %v1159
      %1161 = vmatprep.mubr.bf16.mxu0 %v838
      %1162 = vmatmul.mubr.bf16.gmra.mxu0 %v837
      %v1163 = vpop.f32.mrf.mxu0
      %v1164 = vadd.f32 %v892, %v1163
      %v1165 = vpop.f32.mrf.mxu0
      %v1166 = vadd.f32 %v896, %v1165
      %v1167 = vpop.f32.mrf.mxu0
      %v1168 = vadd.f32 %v892, %v1167
      %v1169 = vpop.f32.mrf.mxu0
      %v1170 = vadd.f32 %v896, %v1169
      %1171 = vmatprep.mubr.bf16.mxu0 %v840
      %1172 = vmatmul.mubr.bf16.gmra.mxu0 %v839
      %v1173 = vpop.f32.mrf.mxu0
      %v1174 = vadd.f32 %v892, %v1173
      %v1175 = vpop.f32.mrf.mxu0
      %v1176 = vadd.f32 %v896, %v1175
      %v1177 = vpop.f32.mrf.mxu0
      %v1178 = vadd.f32 %v892, %v1177
      %v1179 = vpop.f32.mrf.mxu0
      %v1180 = vadd.f32 %v896, %v1179
      %1181 = vmatprep.mubr.bf16.mxu0 %v842
      %1182 = vmatmul.mubr.bf16.gmra.mxu0 %v841
      %v1183 = vpop.f32.mrf.mxu0
      %v1184 = vadd.f32 %v892, %v1183
      %v1185 = vpop.f32.mrf.mxu0
      %v1186 = vadd.f32 %v896, %v1185
      %v1187 = vpop.f32.mrf.mxu0
      %v1188 = vadd.f32 %v892, %v1187
      %v1189 = vpop.f32.mrf.mxu0
      %v1190 = vadd.f32 %v896, %v1189
      %1191 = vmatprep.mubr.bf16.mxu0 %v844
      %1192 = vmatmul.mubr.bf16.gmra.mxu0 %v843
      %v1193 = vpop.f32.mrf.mxu0
      %v1194 = vadd.f32 %v892, %v1193
      %v1195 = vpop.f32.mrf.mxu0
      %v1196 = vadd.f32 %v896, %v1195
      %v1197 = vpop.f32.mrf.mxu0
      %v1198 = vadd.f32 %v892, %v1197
      %v1199 = vpop.f32.mrf.mxu0
      %v1200 = vadd.f32 %v896, %v1199
      %1201 = vmatprep.mubr.bf16.mxu0 %v846
      %1202 = vmatmul.mubr.bf16.gmra.mxu0 %v845
      %v1203 = vpop.f32.mrf.mxu0
      %v1204 = vadd.f32 %v892, %v1203
      %v1205 = vpop.f32.mrf.mxu0
      %v1206 = vadd.f32 %v896, %v1205
      %v1207 = vpop.f32.mrf.mxu0
      %v1208 = vadd.f32 %v892, %v1207
      %v1209 = vpop.f32.mrf.mxu0
      %v1210 = vadd.f32 %v896, %v1209
      %1211 = vmatprep.mubr.bf16.mxu0 %v848
      %1212 = vmatmul.mubr.bf16.gmra.mxu0 %v847
      %v1213 = vpop.f32.mrf.mxu0
      %v1214 = vadd.f32 %v892, %v1213
      %v1215 = vpop.f32.mrf.mxu0
      %v1216 = vadd.f32 %v896, %v1215
      %v1217 = vpop.f32.mrf.mxu0
      %v1218 = vadd.f32 %v892, %v1217
      %v1219 = vpop.f32.mrf.mxu0
      %v1220 = vadd.f32 %v896, %v1219
      %1221 = vmatprep.mubr.bf16.mxu0 %v850
      %1222 = vmatmul.mubr.bf16.gmra.mxu0 %v849
      %v1223 = vpop.f32.mrf.mxu0
      %v1224 = vadd.f32 %v892, %v1223
      %v1225 = vpop.f32.mrf.mxu0
      %v1226 = vadd.f32 %v896, %v1225
      %v1227 = vpop.f32.mrf.mxu0
      %v1228 = vadd.f32 %v892, %v1227
      %v1229 = vpop.f32.mrf.mxu0
      %v1230 = vadd.f32 %v896, %v1229
      %1231 = vmatprep.mubr.bf16.mxu0 %v852
      %1232 = vmatmul.mubr.bf16.gmra.mxu0 %v851
      %v1233 = vpop.f32.mrf.mxu0
      %v1234 = vadd.f32 %v892, %v1233
      %v1235 = vpop.f32.mrf.mxu0
      %v1236 = vadd.f32 %v896, %v1235
      %v1237 = vpop.f32.mrf.mxu0
      %v1238 = vadd.f32 %v892, %v1237
      %v1239 = vpop.f32.mrf.mxu0
      %v1240 = vadd.f32 %v896, %v1239
      %1241 = vmatprep.mubr.bf16.mxu0 %v854
      %1242 = vmatmul.mubr.bf16.gmra.mxu0 %v853
      %v1243 = vpop.f32.mrf.mxu0
      %v1244 = vadd.f32 %v892, %v1243
      %v1245 = vpop.f32.mrf.mxu0
      %v1246 = vadd.f32 %v896, %v1245
      %v1247 = vpop.f32.mrf.mxu0
      %v1248 = vadd.f32 %v892, %v1247
      %v1249 = vpop.f32.mrf.mxu0
      %v1250 = vadd.f32 %v896, %v1249
      %1251 = vdwg.mxu0
      %v1252 = vmax.f32 %v1094, 0.0
      %v1253 = vmax.f32 %v1096, 0.0
      %v1254 = vmax.f32 %v1098, 0.0
      %v1255 = vmax.f32 %v1100, 0.0
      %v1256 = vmax.f32 %v1104, 0.0
      %v1257 = vmax.f32 %v1106, 0.0
      %v1258 = vmax.f32 %v1108, 0.0
      %v1259 = vmax.f32 %v1110, 0.0
      %v1260 = vmax.f32 %v1114, 0.0
      %v1261 = vmax.f32 %v1116, 0.0
      %v1262 = vmax.f32 %v1118, 0.0
      %v1263 = vmax.f32 %v1120, 0.0
      %v1264 = vmax.f32 %v1124, 0.0
      %v1265 = vmax.f32 %v1126, 0.0
      %v1266 = vmax.f32 %v1128, 0.0
      %v1267 = vmax.f32 %v1130, 0.0
      %v1268 = vmax.f32 %v1134, 0.0
      %v1269 = vmax.f32 %v1136, 0.0
      %v1270 = vmax.f32 %v1138, 0.0
      %v1271 = vmax.f32 %v1140, 0.0
      %v1272 = vmax.f32 %v1144, 0.0
      %v1273 = vmax.f32 %v1146, 0.0
      %v1274 = vmax.f32 %v1148, 0.0
      %v1275 = vmax.f32 %v1150, 0.0
      %v1276 = vmax.f32 %v1154, 0.0
      %v1277 = vmax.f32 %v1156, 0.0
      %v1278 = vmax.f32 %v1158, 0.0
      %v1279 = vmax.f32 %v1160, 0.0
      %v1280 = vmax.f32 %v1164, 0.0
      %v1281 = vmax.f32 %v1166, 0.0
      %v1282 = vmax.f32 %v1168, 0.0
      %v1283 = vmax.f32 %v1170, 0.0
      %v1284 = vmax.f32 %v1174, 0.0
      %v1285 = vmax.f32 %v1176, 0.0
      %v1286 = vmax.f32 %v1178, 0.0
      %v1287 = vmax.f32 %v1180, 0.0
      %v1288 = vmax.f32 %v1184, 0.0
      %v1289 = vmax.f32 %v1186, 0.0
      %v1290 = vmax.f32 %v1188, 0.0
      %v1291 = vmax.f32 %v1190, 0.0
      %v1292 = vmax.f32 %v1194, 0.0
      %v1293 = vmax.f32 %v1196, 0.0
      %v1294 = vmax.f32 %v1198, 0.0
      %v1295 = vmax.f32 %v1200, 0.0
      %v1296 = vmax.f32 %v1204, 0.0
      %v1297 = vmax.f32 %v1206, 0.0
      %v1298 = vmax.f32 %v1208, 0.0
      %v1299 = vmax.f32 %v1210, 0.0
      %v1300 = vmax.f32 %v1214, 0.0
      %v1301 = vmax.f32 %v1216, 0.0
      %v1302 = vmax.f32 %v1218, 0.0
      %v1303 = vmax.f32 %v1220, 0.0
      %v1304 = vmax.f32 %v1224, 0.0
      %v1305 = vmax.f32 %v1226, 0.0
      %v1306 = vmax.f32 %v1228, 0.0
      %v1307 = vmax.f32 %v1230, 0.0
      %v1308 = vmax.f32 %v1234, 0.0
      %v1309 = vmax.f32 %v1236, 0.0
      %v1310 = vmax.f32 %v1238, 0.0
      %v1311 = vmax.f32 %v1240, 0.0
      %v1312 = vmax.f32 %v1244, 0.0
      %v1313 = vmax.f32 %v1246, 0.0
      %v1314 = vmax.f32 %v1248, 0.0
      %v1315 = vmax.f32 %v1250, 0.0
      %v1316 = vpack.c.bf16 %v1254, %v1252
      %v1317 = vpack.c.bf16 %v1255, %v1253
      %v1318 = vpack.c.bf16 %v1258, %v1256
      %v1319 = vpack.c.bf16 %v1259, %v1257
      %v1320 = vpack.c.bf16 %v1262, %v1260
      %v1321 = vpack.c.bf16 %v1263, %v1261
      %v1322 = vpack.c.bf16 %v1266, %v1264
      %v1323 = vpack.c.bf16 %v1267, %v1265
      %v1324 = vpack.c.bf16 %v1270, %v1268
      %v1325 = vpack.c.bf16 %v1271, %v1269
      %v1326 = vpack.c.bf16 %v1274, %v1272
      %v1327 = vpack.c.bf16 %v1275, %v1273
      %v1328 = vpack.c.bf16 %v1278, %v1276
      %v1329 = vpack.c.bf16 %v1279, %v1277
      %v1330 = vpack.c.bf16 %v1282, %v1280
      %v1331 = vpack.c.bf16 %v1283, %v1281
      %v1332 = vpack.c.bf16 %v1286, %v1284
      %v1333 = vpack.c.bf16 %v1287, %v1285
      %v1334 = vpack.c.bf16 %v1290, %v1288
      %v1335 = vpack.c.bf16 %v1291, %v1289
      %v1336 = vpack.c.bf16 %v1294, %v1292
      %v1337 = vpack.c.bf16 %v1295, %v1293
      %v1338 = vpack.c.bf16 %v1298, %v1296
      %v1339 = vpack.c.bf16 %v1299, %v1297
      %v1340 = vpack.c.bf16 %v1302, %v1300
      %v1341 = vpack.c.bf16 %v1303, %v1301
      %v1342 = vpack.c.bf16 %v1306, %v1304
      %v1343 = vpack.c.bf16 %v1307, %v1305
      %v1344 = vpack.c.bf16 %v1310, %v1308
      %v1345 = vpack.c.bf16 %v1311, %v1309
      %v1346 = vpack.c.bf16 %v1314, %v1312
      %v1347 = vpack.c.bf16 %v1315, %v1313
      %v1348 = vld [vmem:[%s356] sm:$0x3]
      %v1349 = vlaneseq
      %v1350 = vshrl.u32 %v1349, 7
      %v1351 = vlaneseq
      %v1352 = vshrl.u32 %v1351, 7
      %v1353 = vsub.s32 0, %v1352
      %v1354 = vrot.slane %v1348, %v1353
      %v1355 = vlaneseq
      %v1356 = vshrl.u32 %v1355, 7
      %v1357 = vsub.s32 1, %v1356
      %v1358 = vrot.slane %v1348, %v1357
      %vm1359 = vcmp.eq.s32.totalorder %v1350, %v1354
      %vm1360 = vcmp.eq.s32.totalorder %v1350, %v1358
      %v1361 = vsel %vm1359, 1, 0
      %v1362 = vsel %vm1360, 1, 0
      %v1363 = vcvt.s32.f32 %v1361
      %v1364 = vcvt.s32.f32 %v1362
      %v1365 = vpack.c.bf16 %v1363, %v1363
      %v1366 = vpack.c.bf16 %v1364, %v1364
      %v1367 = vld [vmem:[%s364] sm:$0xff]
      %1368 = vmatprep.subr.bf16.mxu0 %v1331
      %1369 = vmatpush1.bf16.msra.mxu0 %v1330
      %1370 = vmatprep.subr.bf16.mxu0 %v1329
      %1371 = vmatpush1.bf16.msra.mxu0 %v1328
      %1372 = vmatprep.subr.bf16.mxu0 %v1327
      %1373 = vmatpush1.bf16.msra.mxu0 %v1326
      %1374 = vmatprep.subr.bf16.mxu0 %v1325
      %1375 = vmatpush1.bf16.msra.mxu0 %v1324
      %1376 = vmatprep.subr.bf16.mxu0 %v1323
      %1377 = vmatpush1.bf16.msra.mxu0 %v1322
      %1378 = vmatprep.subr.bf16.mxu0 %v1321
      %1379 = vmatpush1.bf16.msra.mxu0 %v1320
      %1380 = vmatprep.subr.bf16.mxu0 %v1319
      %1381 = vmatpush1.bf16.msra.mxu0 %v1318
      %1382 = vmatprep.subr.bf16.mxu0 %v1317
      %1383 = vmatpush1.bf16.msra.mxu0 %v1316
      %1384 = vmatprep.subr.bf16.mxu0 %v1347
      %1385 = vmatpush2.bf16.msra.mxu0 %v1346
      %1386 = vmatprep.subr.bf16.mxu0 %v1345
      %1387 = vmatpush2.bf16.msra.mxu0 %v1344
      %1388 = vmatprep.subr.bf16.mxu0 %v1343
      %1389 = vmatpush2.bf16.msra.mxu0 %v1342
      %1390 = vmatprep.subr.bf16.mxu0 %v1341
      %1391 = vmatpush2.bf16.msra.mxu0 %v1340
      %1392 = vmatprep.subr.bf16.mxu0 %v1339
      %1393 = vmatpush2.bf16.msra.mxu0 %v1338
      %1394 = vmatprep.subr.bf16.mxu0 %v1337
      %1395 = vmatpush2.bf16.msra.mxu0 %v1336
      %1396 = vmatprep.subr.bf16.mxu0 %v1335
      %1397 = vmatpush2.bf16.msra.mxu0 %v1334
      %1398 = vmatprep.subr.bf16.mxu0 %v1333
      %1399 = vmatpush2.bf16.msra.mxu0 %v1332
      %1400 = vmatprep.mubr.bf16.mxu0 %v1366
      %1401 = vmatmul.mubr.bf16.gmra.mxu0 %v1365
      %v1402 = vpop.f32.mrf.mxu0
      %v1403 = vadd.f32 0.0, %v1402
      %v1404 = vpop.f32.mrf.mxu0
      %v1405 = vadd.f32 0.0, %v1404
      %v1406 = vpop.f32.mrf.mxu0
      %v1407 = vpop.f32.mrf.mxu0
      %1408 = vdwg.mxu0
      %v1411 = vcombine.low %v1403, %v1405
      %v1413 = vadd.f32 %v1367, %v1411
      %1414 = vst [vmem:[%s364] sm:$0xff] %v1413
      %v1415 = vadd.s32 %v1350, 8
      %v1416 = vadd.s32 %v1350, 16
      %v1417 = vadd.s32 %v1350, 24
      %v1418 = vadd.s32 %v1350, 32
      %v1419 = vadd.s32 %v1350, 40
      %v1420 = vadd.s32 %v1350, 48
      %v1421 = vadd.s32 %v1350, 56
      %v1422 = vadd.s32 %v1350, 64
      %v1423 = vadd.s32 %v1350, 72
      %v1424 = vadd.s32 %v1350, 80
      %v1425 = vadd.s32 %v1350, 88
      %v1426 = vadd.s32 %v1350, 96
      %v1427 = vadd.s32 %v1350, 104
      %v1428 = vadd.s32 %v1350, 112
      %v1429 = vadd.s32 %v1350, 120
      %v1430 = vadd.s32 %v1350, 128
      %v1431 = vadd.s32 %v1350, 136
      %v1432 = vadd.s32 %v1350, 144
      %v1433 = vadd.s32 %v1350, 152
      %v1434 = vadd.s32 %v1350, 160
      %v1435 = vadd.s32 %v1350, 168
      %v1436 = vadd.s32 %v1350, 176
      %v1437 = vadd.s32 %v1350, 184
      %v1438 = vadd.s32 %v1350, 192
      %v1439 = vadd.s32 %v1350, 200
      %v1440 = vadd.s32 %v1350, 208
      %v1441 = vadd.s32 %v1350, 216
      %v1442 = vadd.s32 %v1350, 224
      %v1443 = vadd.s32 %v1350, 232
      %v1444 = vadd.s32 %v1350, 240
      %v1445 = vadd.s32 %v1350, 248
      %s1446 = sld [smem:[#allocation4 + %s372]]
      %s1447 = sld [smem:[#allocation5 + %s372]]
      %s1448 = ssub.s32 %s1447, %s1446
      // While loop
      $region49: #{mlpnet_forward.1} parent=43 // loop_pre_header
        _
      $region50: #{mlpnet_forward.1} parent=43 // loop_header
        %s1450 = sphi 0, %s1452
        %p1451 = scmp.ge.s32.totalorder %s1450, %s1448
      $region51: #{mlpnet_forward.1} parent=43 // loop_header_branch
        %1454 = sbr.rel (%p1451) target = $region55
      $region52: #{mlpnet_forward.1} parent=43 // loop_body
        %s1455 = sadd.s32 %s1446, %s1450
        %s1456 = sld [smem:[#allocation3 + %s1455]]
        %s1457 = ssub.s32 %s1456, %s373
        %s1458 = sadd.s32 %s1455, 1
        %s1459 = sld [smem:[#allocation3 + %s1458]]
        %s1460 = ssub.s32 %s1459, %s373
        %v1461 = vstv %s1457
        %vm1462 = vcmp.ge.s32.totalorder %v1350, %v1461
        %vm1463 = vcmp.ge.s32.totalorder %v1415, %v1461
        %vm1464 = vcmp.ge.s32.totalorder %v1416, %v1461
        %vm1465 = vcmp.ge.s32.totalorder %v1417, %v1461
        %vm1466 = vcmp.ge.s32.totalorder %v1418, %v1461
        %vm1467 = vcmp.ge.s32.totalorder %v1419, %v1461
        %vm1468 = vcmp.ge.s32.totalorder %v1420, %v1461
        %vm1469 = vcmp.ge.s32.totalorder %v1421, %v1461
        %vm1470 = vcmp.ge.s32.totalorder %v1422, %v1461
        %vm1471 = vcmp.ge.s32.totalorder %v1423, %v1461
        %vm1472 = vcmp.ge.s32.totalorder %v1424, %v1461
        %vm1473 = vcmp.ge.s32.totalorder %v1425, %v1461
        %vm1474 = vcmp.ge.s32.totalorder %v1426, %v1461
        %vm1475 = vcmp.ge.s32.totalorder %v1427, %v1461
        %vm1476 = vcmp.ge.s32.totalorder %v1428, %v1461
        %vm1477 = vcmp.ge.s32.totalorder %v1429, %v1461
        %vm1478 = vcmp.ge.s32.totalorder %v1430, %v1461
        %vm1479 = vcmp.ge.s32.totalorder %v1431, %v1461
        %vm1480 = vcmp.ge.s32.totalorder %v1432, %v1461
        %vm1481 = vcmp.ge.s32.totalorder %v1433, %v1461
        %vm1482 = vcmp.ge.s32.totalorder %v1434, %v1461
        %vm1483 = vcmp.ge.s32.totalorder %v1435, %v1461
        %vm1484 = vcmp.ge.s32.totalorder %v1436, %v1461
        %vm1485 = vcmp.ge.s32.totalorder %v1437, %v1461
        %vm1486 = vcmp.ge.s32.totalorder %v1438, %v1461
        %vm1487 = vcmp.ge.s32.totalorder %v1439, %v1461
        %vm1488 = vcmp.ge.s32.totalorder %v1440, %v1461
        %vm1489 = vcmp.ge.s32.totalorder %v1441, %v1461
        %vm1490 = vcmp.ge.s32.totalorder %v1442, %v1461
        %vm1491 = vcmp.ge.s32.totalorder %v1443, %v1461
        %vm1492 = vcmp.ge.s32.totalorder %v1444, %v1461
        %vm1493 = vcmp.ge.s32.totalorder %v1445, %v1461
        %v1494 = vstv %s1460
        %vm1495 = vcmp.lt.s32.totalorder %v1350, %v1494
        %vm1496 = vcmp.lt.s32.totalorder %v1415, %v1494
        %vm1497 = vcmp.lt.s32.totalorder %v1416, %v1494
        %vm1498 = vcmp.lt.s32.totalorder %v1417, %v1494
        %vm1499 = vcmp.lt.s32.totalorder %v1418, %v1494
        %vm1500 = vcmp.lt.s32.totalorder %v1419, %v1494
        %vm1501 = vcmp.lt.s32.totalorder %v1420, %v1494
        %vm1502 = vcmp.lt.s32.totalorder %v1421, %v1494
        %vm1503 = vcmp.lt.s32.totalorder %v1422, %v1494
        %vm1504 = vcmp.lt.s32.totalorder %v1423, %v1494
        %vm1505 = vcmp.lt.s32.totalorder %v1424, %v1494
        %vm1506 = vcmp.lt.s32.totalorder %v1425, %v1494
        %vm1507 = vcmp.lt.s32.totalorder %v1426, %v1494
        %vm1508 = vcmp.lt.s32.totalorder %v1427, %v1494
        %vm1509 = vcmp.lt.s32.totalorder %v1428, %v1494
        %vm1510 = vcmp.lt.s32.totalorder %v1429, %v1494
        %vm1511 = vcmp.lt.s32.totalorder %v1430, %v1494
        %vm1512 = vcmp.lt.s32.totalorder %v1431, %v1494
        %vm1513 = vcmp.lt.s32.totalorder %v1432, %v1494
        %vm1514 = vcmp.lt.s32.totalorder %v1433, %v1494
        %vm1515 = vcmp.lt.s32.totalorder %v1434, %v1494
        %vm1516 = vcmp.lt.s32.totalorder %v1435, %v1494
        %vm1517 = vcmp.lt.s32.totalorder %v1436, %v1494
        %vm1518 = vcmp.lt.s32.totalorder %v1437, %v1494
        %vm1519 = vcmp.lt.s32.totalorder %v1438, %v1494
        %vm1520 = vcmp.lt.s32.totalorder %v1439, %v1494
        %vm1521 = vcmp.lt.s32.totalorder %v1440, %v1494
        %vm1522 = vcmp.lt.s32.totalorder %v1441, %v1494
        %vm1523 = vcmp.lt.s32.totalorder %v1442, %v1494
        %vm1524 = vcmp.lt.s32.totalorder %v1443, %v1494
        %vm1525 = vcmp.lt.s32.totalorder %v1444, %v1494
        %vm1526 = vcmp.lt.s32.totalorder %v1445, %v1494
        %vm1527 = vmand %vm1462, %vm1495
        %vm1528 = vmand %vm1463, %vm1496
        %vm1529 = vmand %vm1464, %vm1497
        %vm1530 = vmand %vm1465, %vm1498
        %vm1531 = vmand %vm1466, %vm1499
        %vm1532 = vmand %vm1467, %vm1500
        %vm1533 = vmand %vm1468, %vm1501
        %vm1534 = vmand %vm1469, %vm1502
        %vm1535 = vmand %vm1470, %vm1503
        %vm1536 = vmand %vm1471, %vm1504
        %vm1537 = vmand %vm1472, %vm1505
        %vm1538 = vmand %vm1473, %vm1506
        %vm1539 = vmand %vm1474, %vm1507
        %vm1540 = vmand %vm1475, %vm1508
        %vm1541 = vmand %vm1476, %vm1509
        %vm1542 = vmand %vm1477, %vm1510
        %vm1543 = vmand %vm1478, %vm1511
        %vm1544 = vmand %vm1479, %vm1512
        %vm1545 = vmand %vm1480, %vm1513
        %vm1546 = vmand %vm1481, %vm1514
        %vm1547 = vmand %vm1482, %vm1515
        %vm1548 = vmand %vm1483, %vm1516
        %vm1549 = vmand %vm1484, %vm1517
        %vm1550 = vmand %vm1485, %vm1518
        %vm1551 = vmand %vm1486, %vm1519
        %vm1552 = vmand %vm1487, %vm1520
        %vm1553 = vmand %vm1488, %vm1521
        %vm1554 = vmand %vm1489, %vm1522
        %vm1555 = vmand %vm1490, %vm1523
        %vm1556 = vmand %vm1491, %vm1524
        %vm1557 = vmand %vm1492, %vm1525
        %vm1558 = vmand %vm1493, %vm1526
        %v1559 = vsel %vm1527, 1, 0
        %v1560 = vsel %vm1528, 1, 0
        %v1561 = vsel %vm1529, 1, 0
        %v1562 = vsel %vm1530, 1, 0
        %v1563 = vsel %vm1531, 1, 0
        %v1564 = vsel %vm1532, 1, 0
        %v1565 = vsel %vm1533, 1, 0
        %v1566 = vsel %vm1534, 1, 0
        %v1567 = vsel %vm1535, 1, 0
        %v1568 = vsel %vm1536, 1, 0
        %v1569 = vsel %vm1537, 1, 0
        %v1570 = vsel %vm1538, 1, 0
        %v1571 = vsel %vm1539, 1, 0
        %v1572 = vsel %vm1540, 1, 0
        %v1573 = vsel %vm1541, 1, 0
        %v1574 = vsel %vm1542, 1, 0
        %v1575 = vsel %vm1543, 1, 0
        %v1576 = vsel %vm1544, 1, 0
        %v1577 = vsel %vm1545, 1, 0
        %v1578 = vsel %vm1546, 1, 0
        %v1579 = vsel %vm1547, 1, 0
        %v1580 = vsel %vm1548, 1, 0
        %v1581 = vsel %vm1549, 1, 0
        %v1582 = vsel %vm1550, 1, 0
        %v1583 = vsel %vm1551, 1, 0
        %v1584 = vsel %vm1552, 1, 0
        %v1585 = vsel %vm1553, 1, 0
        %v1586 = vsel %vm1554, 1, 0
        %v1587 = vsel %vm1555, 1, 0
        %v1588 = vsel %vm1556, 1, 0
        %v1589 = vsel %vm1557, 1, 0
        %v1590 = vsel %vm1558, 1, 0
        %vm1591 = vcmp.eq.s32.totalorder %v1559, 1
        %vm1592 = vcmp.eq.s32.totalorder %v1560, 1
        %vm1593 = vcmp.eq.s32.totalorder %v1561, 1
        %vm1594 = vcmp.eq.s32.totalorder %v1562, 1
        %vm1595 = vcmp.eq.s32.totalorder %v1563, 1
        %vm1596 = vcmp.eq.s32.totalorder %v1564, 1
        %vm1597 = vcmp.eq.s32.totalorder %v1565, 1
        %vm1598 = vcmp.eq.s32.totalorder %v1566, 1
        %vm1599 = vcmp.eq.s32.totalorder %v1567, 1
        %vm1600 = vcmp.eq.s32.totalorder %v1568, 1
        %vm1601 = vcmp.eq.s32.totalorder %v1569, 1
        %vm1602 = vcmp.eq.s32.totalorder %v1570, 1
        %vm1603 = vcmp.eq.s32.totalorder %v1571, 1
        %vm1604 = vcmp.eq.s32.totalorder %v1572, 1
        %vm1605 = vcmp.eq.s32.totalorder %v1573, 1
        %vm1606 = vcmp.eq.s32.totalorder %v1574, 1
        %vm1607 = vcmp.eq.s32.totalorder %v1575, 1
        %vm1608 = vcmp.eq.s32.totalorder %v1576, 1
        %vm1609 = vcmp.eq.s32.totalorder %v1577, 1
        %vm1610 = vcmp.eq.s32.totalorder %v1578, 1
        %vm1611 = vcmp.eq.s32.totalorder %v1579, 1
        %vm1612 = vcmp.eq.s32.totalorder %v1580, 1
        %vm1613 = vcmp.eq.s32.totalorder %v1581, 1
        %vm1614 = vcmp.eq.s32.totalorder %v1582, 1
        %vm1615 = vcmp.eq.s32.totalorder %v1583, 1
        %vm1616 = vcmp.eq.s32.totalorder %v1584, 1
        %vm1617 = vcmp.eq.s32.totalorder %v1585, 1
        %vm1618 = vcmp.eq.s32.totalorder %v1586, 1
        %vm1619 = vcmp.eq.s32.totalorder %v1587, 1
        %vm1620 = vcmp.eq.s32.totalorder %v1588, 1
        %vm1621 = vcmp.eq.s32.totalorder %v1589, 1
        %vm1622 = vcmp.eq.s32.totalorder %v1590, 1
        %v1623 = vsel %vm1591, %v1252, -1e+30
        %v1624 = vsel %vm1591, %v1253, -1e+30
        %v1625 = vsel %vm1592, %v1254, -1e+30
        %v1626 = vsel %vm1592, %v1255, -1e+30
        %v1627 = vsel %vm1593, %v1256, -1e+30
        %v1628 = vsel %vm1593, %v1257, -1e+30
        %v1629 = vsel %vm1594, %v1258, -1e+30
        %v1630 = vsel %vm1594, %v1259, -1e+30
        %v1631 = vsel %vm1595, %v1260, -1e+30
        %v1632 = vsel %vm1595, %v1261, -1e+30
        %v1633 = vsel %vm1596, %v1262, -1e+30
        %v1634 = vsel %vm1596, %v1263, -1e+30
        %v1635 = vsel %vm1597, %v1264, -1e+30
        %v1636 = vsel %vm1597, %v1265, -1e+30
        %v1637 = vsel %vm1598, %v1266, -1e+30
        %v1638 = vsel %vm1598, %v1267, -1e+30
        %v1639 = vsel %vm1599, %v1268, -1e+30
        %v1640 = vsel %vm1599, %v1269, -1e+30
        %v1641 = vsel %vm1600, %v1270, -1e+30
        %v1642 = vsel %vm1600, %v1271, -1e+30
        %v1643 = vsel %vm1601, %v1272, -1e+30
        %v1644 = vsel %vm1601, %v1273, -1e+30
        %v1645 = vsel %vm1602, %v1274, -1e+30
        %v1646 = vsel %vm1602, %v1275, -1e+30
        %v1647 = vsel %vm1603, %v1276, -1e+30
        %v1648 = vsel %vm1603, %v1277, -1e+30
        %v1649 = vsel %vm1604, %v1278, -1e+30
        %v1650 = vsel %vm1604, %v1279, -1e+30
        %v1651 = vsel %vm1605, %v1280, -1e+30
        %v1652 = vsel %vm1605, %v1281, -1e+30
        %v1653 = vsel %vm1606, %v1282, -1e+30
        %v1654 = vsel %vm1606, %v1283, -1e+30
        %v1655 = vsel %vm1607, %v1284, -1e+30
        %v1656 = vsel %vm1607, %v1285, -1e+30
        %v1657 = vsel %vm1608, %v1286, -1e+30
        %v1658 = vsel %vm1608, %v1287, -1e+30
        %v1659 = vsel %vm1609, %v1288, -1e+30
        %v1660 = vsel %vm1609, %v1289, -1e+30
        %v1661 = vsel %vm1610, %v1290, -1e+30
        %v1662 = vsel %vm1610, %v1291, -1e+30
        %v1663 = vsel %vm1611, %v1292, -1e+30
        %v1664 = vsel %vm1611, %v1293, -1e+30
        %v1665 = vsel %vm1612, %v1294, -1e+30
        %v1666 = vsel %vm1612, %v1295, -1e+30
        %v1667 = vsel %vm1613, %v1296, -1e+30
        %v1668 = vsel %vm1613, %v1297, -1e+30
        %v1669 = vsel %vm1614, %v1298, -1e+30
        %v1670 = vsel %vm1614, %v1299, -1e+30
        %v1671 = vsel %vm1615, %v1300, -1e+30
        %v1672 = vsel %vm1615, %v1301, -1e+30
        %v1673 = vsel %vm1616, %v1302, -1e+30
        %v1674 = vsel %vm1616, %v1303, -1e+30
        %v1675 = vsel %vm1617, %v1304, -1e+30
        %v1676 = vsel %vm1617, %v1305, -1e+30
        %v1677 = vsel %vm1618, %v1306, -1e+30
        %v1678 = vsel %vm1618, %v1307, -1e+30
        %v1679 = vsel %vm1619, %v1308, -1e+30
        %v1680 = vsel %vm1619, %v1309, -1e+30
        %v1681 = vsel %vm1620, %v1310, -1e+30
        %v1682 = vsel %vm1620, %v1311, -1e+30
        %v1683 = vsel %vm1621, %v1312, -1e+30
        %v1684 = vsel %vm1621, %v1313, -1e+30
        %v1685 = vsel %vm1622, %v1314, -1e+30
        %v1686 = vsel %vm1622, %v1315, -1e+30
        %v1687 = vmax.f32 %v1623, %v1627
        %v1688 = vmax.f32 %v1625, %v1629
        %v1689 = vmax.f32 %v1687, %v1631
        %v1690 = vmax.f32 %v1688, %v1633
        %v1691 = vmax.f32 %v1689, %v1635
        %v1692 = vmax.f32 %v1690, %v1637
        %v1693 = vmax.f32 %v1691, %v1639
        %v1694 = vmax.f32 %v1692, %v1641
        %v1695 = vmax.f32 %v1693, %v1643
        %v1696 = vmax.f32 %v1694, %v1645
        %v1697 = vmax.f32 %v1695, %v1647
        %v1698 = vmax.f32 %v1696, %v1649
        %v1699 = vmax.f32 %v1697, %v1651
        %v1700 = vmax.f32 %v1698, %v1653
        %v1701 = vmax.f32 %v1699, %v1655
        %v1702 = vmax.f32 %v1700, %v1657
        %v1703 = vmax.f32 %v1701, %v1659
        %v1704 = vmax.f32 %v1702, %v1661
        %v1705 = vmax.f32 %v1703, %v1663
        %v1706 = vmax.f32 %v1704, %v1665
        %v1707 = vmax.f32 %v1705, %v1667
        %v1708 = vmax.f32 %v1706, %v1669
        %v1709 = vmax.f32 %v1707, %v1671
        %v1710 = vmax.f32 %v1708, %v1673
        %v1711 = vmax.f32 %v1709, %v1675
        %v1712 = vmax.f32 %v1710, %v1677
        %v1713 = vmax.f32 %v1711, %v1679
        %v1714 = vmax.f32 %v1712, %v1681
        %v1715 = vmax.f32 %v1713, %v1683
        %v1716 = vmax.f32 %v1714, %v1685
        %v1717 = vmax.f32 %v1715, %v1716
        %v1718 = vrot.slane %v1717, 4
        %v1719 = vmax.f32 %v1717, %v1718
        %v1720 = vrot.slane %v1719, 2
        %v1721 = vmax.f32 %v1719, %v1720
        %v1722 = vrot.slane %v1721, 1
        %v1723 = vmax.f32 %v1721, %v1722
        %v1724 = vmax.f32 %v1624, %v1628
        %v1725 = vmax.f32 %v1626, %v1630
        %v1726 = vmax.f32 %v1724, %v1632
        %v1727 = vmax.f32 %v1725, %v1634
        %v1728 = vmax.f32 %v1726, %v1636
        %v1729 = vmax.f32 %v1727, %v1638
        %v1730 = vmax.f32 %v1728, %v1640
        %v1731 = vmax.f32 %v1729, %v1642
        %v1732 = vmax.f32 %v1730, %v1644
        %v1733 = vmax.f32 %v1731, %v1646
        %v1734 = vmax.f32 %v1732, %v1648
        %v1735 = vmax.f32 %v1733, %v1650
        %v1736 = vmax.f32 %v1734, %v1652
        %v1737 = vmax.f32 %v1735, %v1654
        %v1738 = vmax.f32 %v1736, %v1656
        %v1739 = vmax.f32 %v1737, %v1658
        %v1740 = vmax.f32 %v1738, %v1660
        %v1741 = vmax.f32 %v1739, %v1662
        %v1742 = vmax.f32 %v1740, %v1664
        %v1743 = vmax.f32 %v1741, %v1666
        %v1744 = vmax.f32 %v1742, %v1668
        %v1745 = vmax.f32 %v1743, %v1670
        %v1746 = vmax.f32 %v1744, %v1672
        %v1747 = vmax.f32 %v1745, %v1674
        %v1748 = vmax.f32 %v1746, %v1676
        %v1749 = vmax.f32 %v1747, %v1678
        %v1750 = vmax.f32 %v1748, %v1680
        %v1751 = vmax.f32 %v1749, %v1682
        %v1752 = vmax.f32 %v1750, %v1684
        %v1753 = vmax.f32 %v1751, %v1686
        %v1754 = vmax.f32 %v1752, %v1753
        %v1755 = vrot.slane %v1754, 4
        %v1756 = vmax.f32 %v1754, %v1755
        %v1757 = vrot.slane %v1756, 2
        %v1758 = vmax.f32 %v1756, %v1757
        %v1759 = vrot.slane %v1758, 1
        %v1760 = vmax.f32 %v1758, %v1759
        %s1761 = sshra.s32 %s1455, 2
        %s1762 = sand.u32 %s1455, 3
        %s1763 = sshra.s32 %s1455, 2
        %s1764 = sand.u32 %s1455, 3
        %s1765 = smul.u32 %s1761, 2
        %s1766 = smul.u32 %s1765, 4
        %s1767 = sadd.s32 %s1766, %s1764
        %s1768 = scalar_lea.vmem %s369, %s1767
        %v1769 = vld [vmem:[%s1768] ss:$4 sm:$0x3]
        %v1772 = vcombine.low %v1723, %v1760
        %v1774 = vunpack.c.l.s4 1966171168
        %v1775 = vunpack.c.0.s8 %v1774
        %v1776 = vlaneseq
        %v1777 = vshrl.u32 %v1776, 7
        %v1778 = vsub.s32 %v1775, %v1777
        %v1779 = vrot.slane %v1772, %v1778
        %v1781 = vunpack.c.l.s4 1966171168
        %v1782 = vunpack.c.0.s8 %v1781
        %v1783 = vlaneseq
        %v1784 = vshrl.u32 %v1783, 7
        %v1785 = vsub.s32 %v1782, %v1784
        %v1786 = vrot.slane %v1779, %v1785
        %v1788 = vmax.f32 %v1769, %v1786
        %v1789 = vlaneseq
        %vm1790 = vcmp.ge.s32.totalorder %v1789, 0
        %vm1791 = vcmp.lt.s32.totalorder %v1789, 256
        %vm1792 = vmand %vm1790, %vm1791
        %1793 = vst.msk [vmem:[%s1768] ss:$4 sm:$0x3] %vm1792, %v1788
      $region53: #{mlpnet_forward.1} parent=43 // loop_footer
        %s1452 = sadd.s32 %s1450, 1
      $region54: #{mlpnet_forward.1} parent=43 // loop_footer_branch
        %1449 = sbr.rel target = $region50
      $region55: #{mlpnet_forward.1} parent=43 // loop_exit
        _
      %p1794 = scmp.lt.s32.totalorder %s40, 1
      %s1795 = scalar_select %p1794, %s40, 1
      %s1796 = smul.addr %s1795, 2
      %s1797 = smul.addr %s1796, 4
      %s1798 = scalar_lea.vmem %s9, %s1797
      %p1799 = scmp.lt.s32.totalorder %s40, 1
      %s1800 = scalar_select %p1799, %s40, 1
      %s1801 = smul.addr %s1800, 2
      %s1802 = smul.addr %s1801, 4
      %s1803 = scalar_lea.vmem %s10, %s1802
      // Predicated region
      $region56: #{mlpnet_forward.1} parent=43 // pred_check
        %p1804 = pneg %p210
      $region57: #{mlpnet_forward.1} parent=43 // pred_check_branch
        %1806 = sbr.rel (%p1804) target = $region59
      $region58: #{mlpnet_forward.1} parent=43 // pred_region
        _
      $region59: #{mlpnet_forward.1} parent=43 // pred_fallthru
        _
      // Predicated region
      $region60: #{mlpnet_forward.1} parent=43 // pred_check
        %p1807 = pneg %p236
      $region61: #{mlpnet_forward.1} parent=43 // pred_check_branch
        %1809 = sbr.rel (%p1807) target = $region63
      $region62: #{mlpnet_forward.1} parent=43 // pred_region
        _
      $region63: #{mlpnet_forward.1} parent=43 // pred_fallthru
        _
    $region44: #{mlpnet_forward.1} parent=5 // pred_fallthru
      _
    %p1810 = scmp.le.s32.totalorder 2, %s31
    // Predicated region
    $region64: #{mlpnet_forward.1} parent=5 // pred_check
      %p1811 = pneg %p1810
    $region65: #{mlpnet_forward.1} parent=5 // pred_check_branch
      %1813 = sbr.rel (%p1811) target = $region67
    $region66: #{mlpnet_forward.1} parent=5 // pred_region
      %s1814 = ssub.s32 %s31, 2
      // Predicated region
      $region68: #{mlpnet_forward.1} parent=66 // pred_check
        %p1815 = pneg %p216
      $region69: #{mlpnet_forward.1} parent=66 // pred_check_branch
        %1817 = sbr.rel (%p1815) target = $region71
      $region70: #{mlpnet_forward.1} parent=66 // pred_region
        %p1818 = scmp.lt.s32.totalorder %s42, 1
        %s1819 = scalar_select %p1818, %s42, 1
        %s1820 = smul.addr %s1819, 2
        %s1821 = smul.addr %s1820, 4
        %s1822 = scalar_lea.vmem %s9, %s1821
      $region71: #{mlpnet_forward.1} parent=66 // pred_fallthru
        _
      // Predicated region
      $region72: #{mlpnet_forward.1} parent=66 // pred_check
        %p1823 = pneg %p242
      $region73: #{mlpnet_forward.1} parent=66 // pred_check_branch
        %1825 = sbr.rel (%p1823) target = $region75
      $region74: #{mlpnet_forward.1} parent=66 // pred_region
        %p1826 = scmp.lt.s32.totalorder %s42, 1
        %s1827 = scalar_select %p1826, %s42, 1
        %s1828 = smul.addr %s1827, 2
        %s1829 = smul.addr %s1828, 4
        %s1830 = scalar_lea.vmem %s10, %s1829
      $region75: #{mlpnet_forward.1} parent=66 // pred_fallthru
        _
    $region67: #{mlpnet_forward.1} parent=5 // pred_fallthru
      _
  $region6: #{mlpnet_forward.1} parent=0 // loop_footer
    %s35 = sadd.s32 1, %s31
  $region7: #{mlpnet_forward.1} parent=0 // loop_footer_branch
    %30 = sbr.rel target = $region3
  $region8: #{mlpnet_forward.1} parent=0 // loop_exit
    _

</llo_original>
